<compile_context>
chip_gen: v7x
topology: tpu7x:2x2x1
jax: 0.10.0
libtpu: 0.0.40
codegen_flags: <defaults>
</compile_context>

<pallas_src>
import numpy as np
import jax
import jax.numpy as jnp
from jax.experimental import pallas as pl
from jax.experimental.pallas import tpu as pltpu


# ----------------------------------------------------------------------------
# Host-side constants: im2col as a 0/1 gather matrix per (kh, kw) tap.
# G[t, o, s] == 1 iff in-bounds input spatial position s feeds tap t of output
# position o (all-zero rows encode the zero padding).  In-kernel gathering is
# then just an MXU matmul: patch_t = G[t] @ X, with X = (spatial, channels).
# ----------------------------------------------------------------------------
def _make_gather_matrix(h, w, k, stride, pad):
    ho = (h + 2 * pad - k) // stride + 1
    wo = (w + 2 * pad - k) // stride + 1
    g = np.zeros((k * k, ho * wo, h * w), dtype=np.float32)
    for kh in range(k):
        for kw in range(k):
            t = kh * k + kw
            for oh in range(ho):
                ih = oh * stride + kh - pad
                if not (0 <= ih < h):
                    continue
                for ow in range(wo):
                    iw = ow * stride + kw - pad
                    if 0 <= iw < w:
                        g[t, oh * wo + ow, ih * w + iw] = 1.0
    return g, ho, wo


# ----------------------------------------------------------------------------
# In-kernel conv layer: loop over the k*k taps, gather via matmul with the
# constant G[t], multiply by the per-tap (Cin, Cout) weight, accumulate in f32.
# Bias + ReLU + bf16 cast happen once after the loop.
#   x                 : (Cin, S) bf16 if channels_first else (S, Cin) bf16
#   g_ref             : (T, O, S) bf16     w_ref : (T, Cin, Cout) bf16
#   b_ref             : (1, Cout) f32
# returns (O, Cout) bf16 activation, rows in row-major (h, w) spatial order.
# ----------------------------------------------------------------------------
def _conv_taps(x, g_ref, w_ref, b_ref, *, channels_first):
    n_taps, n_out, _ = g_ref.shape
    c_out = w_ref.shape[2]

    def body(t, acc):
        g_t = g_ref[t]                                        # (O, S) bf16
        if channels_first:
            # x is (Cin, S): contract the spatial axis of both operands
            # (same transposed-RHS contraction pattern as flash attention).
            p_t = jax.lax.dot_general(
                g_t, x, (((1,), (1,)), ((), ())),
                preferred_element_type=jnp.float32)           # (O, Cin)
        else:
            p_t = jnp.dot(g_t, x, preferred_element_type=jnp.float32)
        p_t = p_t.astype(jnp.bfloat16)
        return acc + jnp.dot(p_t, w_ref[t],
                             preferred_element_type=jnp.float32)

    acc = jax.lax.fori_loop(0, n_taps, body,
                            jnp.zeros((n_out, c_out), jnp.float32))
    return jnp.maximum(acc + b_ref[...], 0.0).astype(jnp.bfloat16)


# ----------------------------------------------------------------------------
# Fused forward kernel: one sample per grid step.
# ----------------------------------------------------------------------------
def _simple_cnn_kernel(x_ref,
                       g1_ref, w1_ref, b1_ref,
                       g2_ref, w2_ref, b2_ref,
                       g3_ref, w3_ref, b3_ref,
                       fc1w_ref, fc1b_ref,
                       fc2w_ref, fc2b_ref,
                       fc3w_ref, fc3b_ref,
                       o_ref):
    # Input block: (1, C, H*W) f32 in the original NCHW layout.  The layout
    # change to channels-last happens inside the first conv's gather matmul.
    x0 = x_ref[0].astype(jnp.bfloat16)                        # (C, S1)

    a1 = _conv_taps(x0, g1_ref, w1_ref, b1_ref, channels_first=True)   # (S2, 32)
    a2 = _conv_taps(a1, g2_ref, w2_ref, b2_ref, channels_first=False)  # (S3, 64)
    a3 = _conv_taps(a2, g3_ref, w3_ref, b3_ref, channels_first=False)  # (P3, 128)

    # FC1: features flatten in (h, w, c) order == row-major flatten of a3.
    # fc1_w was permuted once (in prepare_params) to match; expressed as a
    # small sum over spatial positions to avoid an in-kernel relayout/reshape.
    n_sp = fc1w_ref.shape[0]
    h = jnp.zeros((1, fc1w_ref.shape[2]), jnp.float32)
    for s in range(n_sp):                                     # static, tiny (4)
        h = h + jnp.dot(a3[s:s + 1, :], fc1w_ref[s],
                        preferred_element_type=jnp.float32)
    h = jnp.maximum(h + fc1b_ref[...], 0.0).astype(jnp.bfloat16)

    h = jnp.dot(h, fc2w_ref[...], preferred_element_type=jnp.float32)
    h = jnp.maximum(h + fc2b_ref[...], 0.0).astype(jnp.bfloat16)

    logits = jnp.dot(h, fc3w_ref[...], preferred_element_type=jnp.float32)
    o_ref[0] = (logits + fc3b_ref[...]).astype(o_ref.dtype)


# ----------------------------------------------------------------------------
# Wrapper: single pallas_call for the whole network.
# ----------------------------------------------------------------------------
def simple_cnn_forward(fp, obs, state=None):
    """obs: (N, C, H, W) float32. Returns (logits, state) like the torch module."""
    n, c, h, w = obs.shape
    num_actions = fp["fc3_b"].shape[-1]
    x = obs.reshape(n, c, h * w)          # metadata-only reshape, stays NCHW

    operands = (
        x,
        fp["g1"], fp["conv1_w"], fp["conv1_b"],
        fp["g2"], fp["conv2_w"], fp["conv2_b"],
        fp["g3"], fp["conv3_w"], fp["conv3_b"],
        fp["fc1_w"], fp["fc1_b"],
        fp["fc2_w"], fp["fc2_b"],
        fp["fc3_w"], fp["fc3_b"],
    )

    def batch_spec(arr):
        r = arr.ndim
        return pl.BlockSpec((1,) + arr.shape[1:],
                            lambda i, _r=r: (i,) + (0,) * (_r - 1))

    def resident_spec(arr):
        # Full-array block, constant index map -> DMA'd once, VMEM-resident.
        r = arr.ndim
        return pl.BlockSpec(arr.shape, lambda i, _r=r: (0,) * _r)

    in_specs = [batch_spec(x)] + [resident_spec(a) for a in operands[1:]]

    out = pl.pallas_call(
        _simple_cnn_kernel,
        out_shape=jax.ShapeDtypeStruct((n, 1, num_actions), jnp.float32),
        grid=(n,),
        in_specs=in_specs,
        out_specs=pl.BlockSpec((1, 1, num_actions), lambda i: (i, 0, 0)),
        compiler_params=pltpu.CompilerParams(
            dimension_semantics=("parallel",)),
    )(*operands)
    return out.reshape(n, num_actions), state


# ----------------------------------------------------------------------------
# Params: generated in PyTorch layout, converted ONCE to kernel-ready layout.
# ----------------------------------------------------------------------------
def _conv_out(s):
    return (s + 2 * 2 - 5) // 2 + 1


def init_params(key, state_shape, num_actions):
    c, h, w = state_shape
    h3 = _conv_out(_conv_out(_conv_out(h)))
    w3 = _conv_out(_conv_out(_conv_out(w)))
    n_flatten = 128 * h3 * w3

    keys = jax.random.split(key, 12)

    def normal(k, shape, scale):
        return scale * jax.random.normal(k, shape, dtype=jnp.float32)

    return {
        "conv1_w": normal(keys[0], (32, c, 5, 5), 0.05),
        "conv1_b": normal(keys[1], (32,), 0.01),
        "conv2_w": normal(keys[2], (64, 32, 5, 5), 0.05),
        "conv2_b": normal(keys[3], (64,), 0.01),
        "conv3_w": normal(keys[4], (128, 64, 5, 5), 0.05),
        "conv3_b": normal(keys[5], (128,), 0.01),
        "fc1_w": normal(keys[6], (n_flatten, 256), 0.05),
        "fc1_b": normal(keys[7], (256,), 0.01),
        "fc2_w": normal(keys[8], (256, 256), 0.05),
        "fc2_b": normal(keys[9], (256,), 0.01),
        "fc3_w": normal(keys[10], (256, num_actions), 0.05),
        "fc3_b": normal(keys[11], (num_actions,), 0.01),
    }


def prepare_params(params, state_shape):
    """One-time conversion to kernel layout:
       * per-tap gather matrices g1/g2/g3 (bf16, 0/1),
       * conv weights as (k*k, Cin, Cout) bf16 (tap order matches G),
       * fc1_w row-permuted from (C,H,W) to (H,W,C) flatten order and split
         per spatial position as (h3*w3, 128, 256),
       * all matmul weights bf16, biases as (1, N) f32."""
    c, h, w = state_shape
    g1, h1, w1 = _make_gather_matrix(h, w, 5, 2, 2)
    g2, h2, w2 = _make_gather_matrix(h1, w1, 5, 2, 2)
    g3, h3, w3 = _make_gather_matrix(h2, w2, 5, 2, 2)

    def conv_w(wt):
        cout, cin, k, _ = wt.shape
        # (cout, cin, kh, kw) -> (kh, kw, cin, cout) -> (k*k, cin, cout)
        return jnp.transpose(wt, (2, 3, 1, 0)).reshape(
            k * k, cin, cout).astype(jnp.bfloat16)

    def bias2d(b):
        return b.reshape(1, -1).astype(jnp.float32)

    c3 = params["conv3_w"].shape[0]
    n_fc = params["fc1_w"].shape[1]
    assert params["fc1_w"].shape[0] == h3 * w3 * c3
    fc1 = params["fc1_w"].reshape(c3, h3, w3, n_fc)
    fc1 = jnp.transpose(fc1, (1, 2, 0, 3)).reshape(h3 * w3, c3, n_fc)

    return {
        "g1": jnp.asarray(g1, dtype=jnp.bfloat16),
        "g2": jnp.asarray(g2, dtype=jnp.bfloat16),
        "g3": jnp.asarray(g3, dtype=jnp.bfloat16),
        "conv1_w": conv_w(params["conv1_w"]), "conv1_b": bias2d(params["conv1_b"]),
        "conv2_w": conv_w(params["conv2_w"]), "conv2_b": bias2d(params["conv2_b"]),
        "conv3_w": conv_w(params["conv3_w"]), "conv3_b": bias2d(params["conv3_b"]),
        "fc1_w": fc1.astype(jnp.bfloat16), "fc1_b": bias2d(params["fc1_b"]),
        "fc2_w": params["fc2_w"].astype(jnp.bfloat16), "fc2_b": bias2d(params["fc2_b"]),
        "fc3_w": params["fc3_w"].astype(jnp.bfloat16), "fc3_b": bias2d(params["fc3_b"]),
    }


# ----------------------------------------------------------------------------
# Pure-JAX f32 reference (PyTorch semantics) for a tolerance check.
# ----------------------------------------------------------------------------
def _reference_forward(params, obs):
    def conv(x, wt, b):
        y = jax.lax.conv_general_dilated(
            x, wt, window_strides=(2, 2), padding=((2, 2), (2, 2)),
            dimension_numbers=("NCHW", "OIHW", "NCHW"))
        return jax.nn.relu(y + b.reshape(1, -1, 1, 1))

    x = conv(obs, params["conv1_w"], params["conv1_b"])
    x = conv(x, params["conv2_w"], params["conv2_b"])
    x = conv(x, params["conv3_w"], params["conv3_b"])
    feat = x.reshape(x.shape[0], -1)                       # NCHW flatten (c,h,w)
    hdn = jax.nn.relu(feat @ params["fc1_w"] + params["fc1_b"])
    hdn = jax.nn.relu(hdn @ params["fc2_w"] + params["fc2_b"])
    return hdn @ params["fc3_w"] + params["fc3_b"]


if __name__ == "__main__":
    state_shape = (4, 16, 16)    # (c, h, w)
    num_actions = 6
    batch = 2

    key = jax.random.PRNGKey(0)
    k_params, k_obs = jax.random.split(key)

    params = init_params(k_params, state_shape, num_actions)
    fast_params = prepare_params(params, state_shape)      # one-time layout prep
    obs = jax.random.normal(k_obs, (batch,) + state_shape, dtype=jnp.float32)

    fwd = jax.jit(simple_cnn_forward)
    logits, state = fwd(fast_params, obs)
    logits = jax.block_until_ready(logits)

    assert logits.shape == (batch, num_actions), logits.shape
    assert logits.dtype == jnp.float32
    assert state is None

    ref = _reference_forward(params, obs)
    max_err = float(jnp.max(jnp.abs(logits - ref)))
    assert max_err < 0.1, f"max abs error vs f32 reference: {max_err}"
    print("KERNEL_OK")
</pallas_src>

<mosaic_0001>
module attributes {stable_mosaic.version = 11 : i64} {
  func.func @_simple_cnn_kernel(%arg0: i32, %arg1: memref<1x4x256xf32, #tpu.memory_space<vmem>>, %arg2: memref<25x64x256xbf16, #tpu.memory_space<vmem>>, %arg3: memref<25x4x32xbf16, #tpu.memory_space<vmem>>, %arg4: memref<1x32xf32, #tpu.memory_space<vmem>>, %arg5: memref<25x16x64xbf16, #tpu.memory_space<vmem>>, %arg6: memref<25x32x64xbf16, #tpu.memory_space<vmem>>, %arg7: memref<1x64xf32, #tpu.memory_space<vmem>>, %arg8: memref<25x4x16xbf16, #tpu.memory_space<vmem>>, %arg9: memref<25x64x128xbf16, #tpu.memory_space<vmem>>, %arg10: memref<1x128xf32, #tpu.memory_space<vmem>>, %arg11: memref<4x128x256xbf16, #tpu.memory_space<vmem>>, %arg12: memref<1x256xf32, #tpu.memory_space<vmem>>, %arg13: memref<256x256xbf16, #tpu.memory_space<vmem>>, %arg14: memref<1x256xf32, #tpu.memory_space<vmem>>, %arg15: memref<256x6xbf16, #tpu.memory_space<vmem>>, %arg16: memref<1x6xf32, #tpu.memory_space<vmem>>, %arg17: memref<1x1x6xf32, #tpu.memory_space<vmem>>) attributes {dimension_semantics = [#tpu.dimension_semantics<parallel>], iteration_bounds = array<i64: 2>, scalar_prefetch = 0 : i64, scratch_operands = 0 : i64, tpu.core_type = #tpu.core_type<tc>, window_params = [{transform_indices = @transform_0, window_bounds = array<i64: 1, 4, 256>}, {pipeline_mode = #tpu.pipeline_mode<synchronous>, transform_indices = @transform_1, window_bounds = array<i64: 25, 64, 256>}, {pipeline_mode = #tpu.pipeline_mode<synchronous>, transform_indices = @transform_2, window_bounds = array<i64: 25, 4, 32>}, {pipeline_mode = #tpu.pipeline_mode<synchronous>, transform_indices = @transform_3, window_bounds = array<i64: 1, 32>}, {pipeline_mode = #tpu.pipeline_mode<synchronous>, transform_indices = @transform_4, window_bounds = array<i64: 25, 16, 64>}, {pipeline_mode = #tpu.pipeline_mode<synchronous>, transform_indices = @transform_5, window_bounds = array<i64: 25, 32, 64>}, {pipeline_mode = #tpu.pipeline_mode<synchronous>, transform_indices = @transform_6, window_bounds = array<i64: 1, 64>}, {pipeline_mode = #tpu.pipeline_mode<synchronous>, transform_indices = @transform_7, window_bounds = array<i64: 25, 4, 16>}, {pipeline_mode = #tpu.pipeline_mode<synchronous>, transform_indices = @transform_8, window_bounds = array<i64: 25, 64, 128>}, {pipeline_mode = #tpu.pipeline_mode<synchronous>, transform_indices = @transform_9, window_bounds = array<i64: 1, 128>}, {pipeline_mode = #tpu.pipeline_mode<synchronous>, transform_indices = @transform_10, window_bounds = array<i64: 4, 128, 256>}, {pipeline_mode = #tpu.pipeline_mode<synchronous>, transform_indices = @transform_11, window_bounds = array<i64: 1, 256>}, {pipeline_mode = #tpu.pipeline_mode<synchronous>, transform_indices = @transform_12, window_bounds = array<i64: 256, 256>}, {pipeline_mode = #tpu.pipeline_mode<synchronous>, transform_indices = @transform_13, window_bounds = array<i64: 1, 256>}, {pipeline_mode = #tpu.pipeline_mode<synchronous>, transform_indices = @transform_14, window_bounds = array<i64: 256, 6>}, {pipeline_mode = #tpu.pipeline_mode<synchronous>, transform_indices = @transform_15, window_bounds = array<i64: 1, 6>}, {transform_indices = @transform_16, window_bounds = array<i64: 1, 1, 6>}]} {
    %c0 = arith.constant 0 : index
    %c0_0 = arith.constant 0 : index
    %c0_1 = arith.constant 0 : index
    %0 = vector.load %arg1[%c0, %c0_0, %c0_1] : memref<1x4x256xf32, #tpu.memory_space<vmem>>, vector<1x4x256xf32>
    %1 = vector.shape_cast %0 : vector<1x4x256xf32> to vector<4x256xf32>
    %2 = arith.truncf %1 : vector<4x256xf32> to vector<4x256xbf16>
    %cst = arith.constant 0.000000e+00 : f32
    %3 = vector.broadcast %cst : f32 to vector<64x32xf32>
    %c0_i32 = arith.constant 0 : i32
    %c25_i32 = arith.constant 25 : i32
    %4 = arith.addi %c0_i32, %c25_i32 : i32
    %c1_i32 = arith.constant 1 : i32
    %5 = scf.for %arg18 = %c0_i32 to %4 step %c1_i32 iter_args(%arg19 = %3) -> (vector<64x32xf32>)  : i32 {
      %70 = arith.index_cast %arg18 : i32 to index
      %c0_53 = arith.constant 0 : index
      %c0_54 = arith.constant 0 : index
      %71 = vector.load %arg2[%70, %c0_53, %c0_54] : memref<25x64x256xbf16, #tpu.memory_space<vmem>>, vector<1x64x256xbf16>
      %72 = vector.shape_cast %71 : vector<1x64x256xbf16> to vector<64x256xbf16>
      %cst_55 = arith.constant dense<0.000000e+00> : vector<64x4xf32>
      %73 = tpu.matmul %72, %2, %cst_55 {dimension_numbers = #tpu.dot_dimension_numbers<[1], [1], [0], [0], [0, 0, 1, 0], [], []>} : vector<64x256xbf16>, vector<4x256xbf16>, vector<64x4xf32> -> vector<64x4xf32>
      %74 = arith.truncf %73 : vector<64x4xf32> to vector<64x4xbf16>
      %75 = arith.index_cast %arg18 : i32 to index
      %c0_56 = arith.constant 0 : index
      %c0_57 = arith.constant 0 : index
      %76 = vector.load %arg3[%75, %c0_56, %c0_57] : memref<25x4x32xbf16, #tpu.memory_space<vmem>>, vector<1x4x32xbf16>
      %77 = vector.shape_cast %76 : vector<1x4x32xbf16> to vector<4x32xbf16>
      %cst_58 = arith.constant dense<0.000000e+00> : vector<64x32xf32>
      %78 = tpu.matmul %74, %77, %cst_58 {dimension_numbers = #tpu.dot_dimension_numbers<[1], [0], [0], [1], [0, 0, 1, 1], [], []>} : vector<64x4xbf16>, vector<4x32xbf16>, vector<64x32xf32> -> vector<64x32xf32>
      %79 = arith.addf %arg19, %78 : vector<64x32xf32>
      scf.yield %79 : vector<64x32xf32>
    }
    %c25_i32_2 = arith.constant 25 : i32
    %c0_3 = arith.constant 0 : index
    %c0_4 = arith.constant 0 : index
    %6 = vector.load %arg4[%c0_3, %c0_4] : memref<1x32xf32, #tpu.memory_space<vmem>>, vector<1x32xf32>
    %7 = vector.broadcast %6 : vector<1x32xf32> to vector<64x32xf32>
    %8 = arith.addf %5, %7 : vector<64x32xf32>
    %cst_5 = arith.constant 0.000000e+00 : f32
    %9 = vector.broadcast %cst_5 : f32 to vector<64x32xf32>
    %10 = arith.maximumf %8, %9 : vector<64x32xf32>
    %11 = arith.truncf %10 : vector<64x32xf32> to vector<64x32xbf16>
    %cst_6 = arith.constant 0.000000e+00 : f32
    %12 = vector.broadcast %cst_6 : f32 to vector<16x64xf32>
    %c0_i32_7 = arith.constant 0 : i32
    %c25_i32_8 = arith.constant 25 : i32
    %13 = arith.addi %c0_i32_7, %c25_i32_8 : i32
    %c1_i32_9 = arith.constant 1 : i32
    %14 = scf.for %arg18 = %c0_i32_7 to %13 step %c1_i32_9 iter_args(%arg19 = %12) -> (vector<16x64xf32>)  : i32 {
      %70 = arith.index_cast %arg18 : i32 to index
      %c0_53 = arith.constant 0 : index
      %c0_54 = arith.constant 0 : index
      %71 = vector.load %arg5[%70, %c0_53, %c0_54] : memref<25x16x64xbf16, #tpu.memory_space<vmem>>, vector<1x16x64xbf16>
      %72 = vector.shape_cast %71 : vector<1x16x64xbf16> to vector<16x64xbf16>
      %cst_55 = arith.constant dense<0.000000e+00> : vector<16x32xf32>
      %73 = tpu.matmul %72, %11, %cst_55 {dimension_numbers = #tpu.dot_dimension_numbers<[1], [0], [0], [1], [0, 0, 1, 1], [], []>} : vector<16x64xbf16>, vector<64x32xbf16>, vector<16x32xf32> -> vector<16x32xf32>
      %74 = arith.truncf %73 : vector<16x32xf32> to vector<16x32xbf16>
      %75 = arith.index_cast %arg18 : i32 to index
      %c0_56 = arith.constant 0 : index
      %c0_57 = arith.constant 0 : index
      %76 = vector.load %arg6[%75, %c0_56, %c0_57] : memref<25x32x64xbf16, #tpu.memory_space<vmem>>, vector<1x32x64xbf16>
      %77 = vector.shape_cast %76 : vector<1x32x64xbf16> to vector<32x64xbf16>
      %cst_58 = arith.constant dense<0.000000e+00> : vector<16x64xf32>
      %78 = tpu.matmul %74, %77, %cst_58 {dimension_numbers = #tpu.dot_dimension_numbers<[1], [0], [0], [1], [0, 0, 1, 1], [], []>} : vector<16x32xbf16>, vector<32x64xbf16>, vector<16x64xf32> -> vector<16x64xf32>
      %79 = arith.addf %arg19, %78 : vector<16x64xf32>
      scf.yield %79 : vector<16x64xf32>
    }
    %c25_i32_10 = arith.constant 25 : i32
    %c0_11 = arith.constant 0 : index
    %c0_12 = arith.constant 0 : index
    %15 = vector.load %arg7[%c0_11, %c0_12] : memref<1x64xf32, #tpu.memory_space<vmem>>, vector<1x64xf32>
    %16 = vector.broadcast %15 : vector<1x64xf32> to vector<16x64xf32>
    %17 = arith.addf %14, %16 : vector<16x64xf32>
    %cst_13 = arith.constant 0.000000e+00 : f32
    %18 = vector.broadcast %cst_13 : f32 to vector<16x64xf32>
    %19 = arith.maximumf %17, %18 : vector<16x64xf32>
    %20 = arith.truncf %19 : vector<16x64xf32> to vector<16x64xbf16>
    %cst_14 = arith.constant 0.000000e+00 : f32
    %21 = vector.broadcast %cst_14 : f32 to vector<4x128xf32>
    %c0_i32_15 = arith.constant 0 : i32
    %c25_i32_16 = arith.constant 25 : i32
    %22 = arith.addi %c0_i32_15, %c25_i32_16 : i32
    %c1_i32_17 = arith.constant 1 : i32
    %23 = scf.for %arg18 = %c0_i32_15 to %22 step %c1_i32_17 iter_args(%arg19 = %21) -> (vector<4x128xf32>)  : i32 {
      %70 = arith.index_cast %arg18 : i32 to index
      %c0_53 = arith.constant 0 : index
      %c0_54 = arith.constant 0 : index
      %71 = vector.load %arg8[%70, %c0_53, %c0_54] : memref<25x4x16xbf16, #tpu.memory_space<vmem>>, vector<1x4x16xbf16>
      %72 = vector.shape_cast %71 : vector<1x4x16xbf16> to vector<4x16xbf16>
      %cst_55 = arith.constant dense<0.000000e+00> : vector<4x64xf32>
      %73 = tpu.matmul %72, %20, %cst_55 {dimension_numbers = #tpu.dot_dimension_numbers<[1], [0], [0], [1], [0, 0, 1, 1], [], []>} : vector<4x16xbf16>, vector<16x64xbf16>, vector<4x64xf32> -> vector<4x64xf32>
      %74 = arith.truncf %73 : vector<4x64xf32> to vector<4x64xbf16>
      %75 = arith.index_cast %arg18 : i32 to index
      %c0_56 = arith.constant 0 : index
      %c0_57 = arith.constant 0 : index
      %76 = vector.load %arg9[%75, %c0_56, %c0_57] : memref<25x64x128xbf16, #tpu.memory_space<vmem>>, vector<1x64x128xbf16>
      %77 = vector.shape_cast %76 : vector<1x64x128xbf16> to vector<64x128xbf16>
      %cst_58 = arith.constant dense<0.000000e+00> : vector<4x128xf32>
      %78 = tpu.matmul %74, %77, %cst_58 {dimension_numbers = #tpu.dot_dimension_numbers<[1], [0], [0], [1], [0, 0, 1, 1], [], []>} : vector<4x64xbf16>, vector<64x128xbf16>, vector<4x128xf32> -> vector<4x128xf32>
      %79 = arith.addf %arg19, %78 : vector<4x128xf32>
      scf.yield %79 : vector<4x128xf32>
    }
    %c25_i32_18 = arith.constant 25 : i32
    %c0_19 = arith.constant 0 : index
    %c0_20 = arith.constant 0 : index
    %24 = vector.load %arg10[%c0_19, %c0_20] : memref<1x128xf32, #tpu.memory_space<vmem>>, vector<1x128xf32>
    %25 = vector.broadcast %24 : vector<1x128xf32> to vector<4x128xf32>
    %26 = arith.addf %23, %25 : vector<4x128xf32>
    %cst_21 = arith.constant 0.000000e+00 : f32
    %27 = vector.broadcast %cst_21 : f32 to vector<4x128xf32>
    %28 = arith.maximumf %26, %27 : vector<4x128xf32>
    %29 = arith.truncf %28 : vector<4x128xf32> to vector<4x128xbf16>
    %cst_22 = arith.constant 0.000000e+00 : f32
    %30 = vector.broadcast %cst_22 : f32 to vector<1x256xf32>
    %31 = vector.extract_strided_slice %29 {offsets = [0, 0], sizes = [1, 128], strides = [1, 1]} : vector<4x128xbf16> to vector<1x128xbf16>
    %c0_23 = arith.constant 0 : index
    %c0_24 = arith.constant 0 : index
    %c0_25 = arith.constant 0 : index
    %32 = vector.load %arg11[%c0_23, %c0_24, %c0_25] : memref<4x128x256xbf16, #tpu.memory_space<vmem>>, vector<1x128x256xbf16>
    %33 = vector.shape_cast %32 : vector<1x128x256xbf16> to vector<128x256xbf16>
    %cst_26 = arith.constant dense<0.000000e+00> : vector<1x256xf32>
    %34 = tpu.matmul %31, %33, %cst_26 {dimension_numbers = #tpu.dot_dimension_numbers<[1], [0], [0], [1], [0, 0, 1, 1], [], []>} : vector<1x128xbf16>, vector<128x256xbf16>, vector<1x256xf32> -> vector<1x256xf32>
    %35 = arith.addf %30, %34 : vector<1x256xf32>
    %36 = vector.extract_strided_slice %29 {offsets = [1, 0], sizes = [1, 128], strides = [1, 1]} : vector<4x128xbf16> to vector<1x128xbf16>
    %c1 = arith.constant 1 : index
    %c0_27 = arith.constant 0 : index
    %c0_28 = arith.constant 0 : index
    %37 = vector.load %arg11[%c1, %c0_27, %c0_28] : memref<4x128x256xbf16, #tpu.memory_space<vmem>>, vector<1x128x256xbf16>
    %38 = vector.shape_cast %37 : vector<1x128x256xbf16> to vector<128x256xbf16>
    %cst_29 = arith.constant dense<0.000000e+00> : vector<1x256xf32>
    %39 = tpu.matmul %36, %38, %cst_29 {dimension_numbers = #tpu.dot_dimension_numbers<[1], [0], [0], [1], [0, 0, 1, 1], [], []>} : vector<1x128xbf16>, vector<128x256xbf16>, vector<1x256xf32> -> vector<1x256xf32>
    %40 = arith.addf %35, %39 : vector<1x256xf32>
    %41 = vector.extract_strided_slice %29 {offsets = [2, 0], sizes = [1, 128], strides = [1, 1]} : vector<4x128xbf16> to vector<1x128xbf16>
    %c2 = arith.constant 2 : index
    %c0_30 = arith.constant 0 : index
    %c0_31 = arith.constant 0 : index
    %42 = vector.load %arg11[%c2, %c0_30, %c0_31] : memref<4x128x256xbf16, #tpu.memory_space<vmem>>, vector<1x128x256xbf16>
    %43 = vector.shape_cast %42 : vector<1x128x256xbf16> to vector<128x256xbf16>
    %cst_32 = arith.constant dense<0.000000e+00> : vector<1x256xf32>
    %44 = tpu.matmul %41, %43, %cst_32 {dimension_numbers = #tpu.dot_dimension_numbers<[1], [0], [0], [1], [0, 0, 1, 1], [], []>} : vector<1x128xbf16>, vector<128x256xbf16>, vector<1x256xf32> -> vector<1x256xf32>
    %45 = arith.addf %40, %44 : vector<1x256xf32>
    %46 = vector.extract_strided_slice %29 {offsets = [3, 0], sizes = [1, 128], strides = [1, 1]} : vector<4x128xbf16> to vector<1x128xbf16>
    %c3 = arith.constant 3 : index
    %c0_33 = arith.constant 0 : index
    %c0_34 = arith.constant 0 : index
    %47 = vector.load %arg11[%c3, %c0_33, %c0_34] : memref<4x128x256xbf16, #tpu.memory_space<vmem>>, vector<1x128x256xbf16>
    %48 = vector.shape_cast %47 : vector<1x128x256xbf16> to vector<128x256xbf16>
    %cst_35 = arith.constant dense<0.000000e+00> : vector<1x256xf32>
    %49 = tpu.matmul %46, %48, %cst_35 {dimension_numbers = #tpu.dot_dimension_numbers<[1], [0], [0], [1], [0, 0, 1, 1], [], []>} : vector<1x128xbf16>, vector<128x256xbf16>, vector<1x256xf32> -> vector<1x256xf32>
    %50 = arith.addf %45, %49 : vector<1x256xf32>
    %c0_36 = arith.constant 0 : index
    %c0_37 = arith.constant 0 : index
    %51 = vector.load %arg12[%c0_36, %c0_37] : memref<1x256xf32, #tpu.memory_space<vmem>>, vector<1x256xf32>
    %52 = arith.addf %50, %51 : vector<1x256xf32>
    %cst_38 = arith.constant 0.000000e+00 : f32
    %53 = vector.broadcast %cst_38 : f32 to vector<1x256xf32>
    %54 = arith.maximumf %52, %53 : vector<1x256xf32>
    %55 = arith.truncf %54 : vector<1x256xf32> to vector<1x256xbf16>
    %c0_39 = arith.constant 0 : index
    %c0_40 = arith.constant 0 : index
    %56 = vector.load %arg13[%c0_39, %c0_40] : memref<256x256xbf16, #tpu.memory_space<vmem>>, vector<256x256xbf16>
    %cst_41 = arith.constant dense<0.000000e+00> : vector<1x256xf32>
    %57 = tpu.matmul %55, %56, %cst_41 {dimension_numbers = #tpu.dot_dimension_numbers<[1], [0], [0], [1], [0, 0, 1, 1], [], []>} : vector<1x256xbf16>, vector<256x256xbf16>, vector<1x256xf32> -> vector<1x256xf32>
    %c0_42 = arith.constant 0 : index
    %c0_43 = arith.constant 0 : index
    %58 = vector.load %arg14[%c0_42, %c0_43] : memref<1x256xf32, #tpu.memory_space<vmem>>, vector<1x256xf32>
    %59 = arith.addf %57, %58 : vector<1x256xf32>
    %cst_44 = arith.constant 0.000000e+00 : f32
    %60 = vector.broadcast %cst_44 : f32 to vector<1x256xf32>
    %61 = arith.maximumf %59, %60 : vector<1x256xf32>
    %62 = arith.truncf %61 : vector<1x256xf32> to vector<1x256xbf16>
    %c0_45 = arith.constant 0 : index
    %c0_46 = arith.constant 0 : index
    %63 = vector.load %arg15[%c0_45, %c0_46] : memref<256x6xbf16, #tpu.memory_space<vmem>>, vector<256x6xbf16>
    %cst_47 = arith.constant dense<0.000000e+00> : vector<1x6xf32>
    %64 = tpu.matmul %62, %63, %cst_47 {dimension_numbers = #tpu.dot_dimension_numbers<[1], [0], [0], [1], [0, 0, 1, 1], [], []>} : vector<1x256xbf16>, vector<256x6xbf16>, vector<1x6xf32> -> vector<1x6xf32>
    %c0_48 = arith.constant 0 : index
    %c0_49 = arith.constant 0 : index
    %65 = vector.load %arg16[%c0_48, %c0_49] : memref<1x6xf32, #tpu.memory_space<vmem>>, vector<1x6xf32>
    %66 = arith.addf %64, %65 : vector<1x6xf32>
    %c0_50 = arith.constant 0 : index
    %c0_51 = arith.constant 0 : index
    %c0_52 = arith.constant 0 : index
    %67 = vector.load %arg17[%c0_50, %c0_51, %c0_52] : memref<1x1x6xf32, #tpu.memory_space<vmem>>, vector<1x1x6xf32>
    %68 = vector.shape_cast %67 : vector<1x1x6xf32> to vector<1x6xf32>
    %69 = vector.shape_cast %66 : vector<1x6xf32> to vector<1x1x6xf32>
    tpu.vector_store %arg17[%c0_50, %c0_51, %c0_52], %69 {strides = array<i32>} : memref<1x1x6xf32, #tpu.memory_space<vmem>>, vector<1x1x6xf32>,
    return
  }
  func.func @transform_0(%arg0: i32) -> (i32, i32, i32) {
    %c0_i32 = arith.constant 0 : i32
    %c0_i32_0 = arith.constant 0 : i32
    %c0_i32_1 = arith.constant 0 : i32
    return %arg0, %c0_i32, %c0_i32_0 : i32, i32, i32
  }
  func.func @transform_1(%arg0: i32) -> (i32, i32, i32) {
    %c0_i32 = arith.constant 0 : i32
    %c0_i32_0 = arith.constant 0 : i32
    %c0_i32_1 = arith.constant 0 : i32
    %c0_i32_2 = arith.constant 0 : i32
    return %c0_i32, %c0_i32_0, %c0_i32_1 : i32, i32, i32
  }
  func.func @transform_2(%arg0: i32) -> (i32, i32, i32) {
    %c0_i32 = arith.constant 0 : i32
    %c0_i32_0 = arith.constant 0 : i32
    %c0_i32_1 = arith.constant 0 : i32
    %c0_i32_2 = arith.constant 0 : i32
    return %c0_i32, %c0_i32_0, %c0_i32_1 : i32, i32, i32
  }
  func.func @transform_3(%arg0: i32) -> (i32, i32) {
    %c0_i32 = arith.constant 0 : i32
    %c0_i32_0 = arith.constant 0 : i32
    %c0_i32_1 = arith.constant 0 : i32
    return %c0_i32, %c0_i32_0 : i32, i32
  }
  func.func @transform_4(%arg0: i32) -> (i32, i32, i32) {
    %c0_i32 = arith.constant 0 : i32
    %c0_i32_0 = arith.constant 0 : i32
    %c0_i32_1 = arith.constant 0 : i32
    %c0_i32_2 = arith.constant 0 : i32
    return %c0_i32, %c0_i32_0, %c0_i32_1 : i32, i32, i32
  }
  func.func @transform_5(%arg0: i32) -> (i32, i32, i32) {
    %c0_i32 = arith.constant 0 : i32
    %c0_i32_0 = arith.constant 0 : i32
    %c0_i32_1 = arith.constant 0 : i32
    %c0_i32_2 = arith.constant 0 : i32
    return %c0_i32, %c0_i32_0, %c0_i32_1 : i32, i32, i32
  }
  func.func @transform_6(%arg0: i32) -> (i32, i32) {
    %c0_i32 = arith.constant 0 : i32
    %c0_i32_0 = arith.constant 0 : i32
    %c0_i32_1 = arith.constant 0 : i32
    return %c0_i32, %c0_i32_0 : i32, i32
  }
  func.func @transform_7(%arg0: i32) -> (i32, i32, i32) {
    %c0_i32 = arith.constant 0 : i32
    %c0_i32_0 = arith.constant 0 : i32
    %c0_i32_1 = arith.constant 0 : i32
    %c0_i32_2 = arith.constant 0 : i32
    return %c0_i32, %c0_i32_0, %c0_i32_1 : i32, i32, i32
  }
  func.func @transform_8(%arg0: i32) -> (i32, i32, i32) {
    %c0_i32 = arith.constant 0 : i32
    %c0_i32_0 = arith.constant 0 : i32
    %c0_i32_1 = arith.constant 0 : i32
    %c0_i32_2 = arith.constant 0 : i32
    return %c0_i32, %c0_i32_0, %c0_i32_1 : i32, i32, i32
  }
  func.func @transform_9(%arg0: i32) -> (i32, i32) {
    %c0_i32 = arith.constant 0 : i32
    %c0_i32_0 = arith.constant 0 : i32
    %c0_i32_1 = arith.constant 0 : i32
    return %c0_i32, %c0_i32_0 : i32, i32
  }
  func.func @transform_10(%arg0: i32) -> (i32, i32, i32) {
    %c0_i32 = arith.constant 0 : i32
    %c0_i32_0 = arith.constant 0 : i32
    %c0_i32_1 = arith.constant 0 : i32
    %c0_i32_2 = arith.constant 0 : i32
    return %c0_i32, %c0_i32_0, %c0_i32_1 : i32, i32, i32
  }
  func.func @transform_11(%arg0: i32) -> (i32, i32) {
    %c0_i32 = arith.constant 0 : i32
    %c0_i32_0 = arith.constant 0 : i32
    %c0_i32_1 = arith.constant 0 : i32
    return %c0_i32, %c0_i32_0 : i32, i32
  }
  func.func @transform_12(%arg0: i32) -> (i32, i32) {
    %c0_i32 = arith.constant 0 : i32
    %c0_i32_0 = arith.constant 0 : i32
    %c0_i32_1 = arith.constant 0 : i32
    return %c0_i32, %c0_i32_0 : i32, i32
  }
  func.func @transform_13(%arg0: i32) -> (i32, i32) {
    %c0_i32 = arith.constant 0 : i32
    %c0_i32_0 = arith.constant 0 : i32
    %c0_i32_1 = arith.constant 0 : i32
    return %c0_i32, %c0_i32_0 : i32, i32
  }
  func.func @transform_14(%arg0: i32) -> (i32, i32) {
    %c0_i32 = arith.constant 0 : i32
    %c0_i32_0 = arith.constant 0 : i32
    %c0_i32_1 = arith.constant 0 : i32
    return %c0_i32, %c0_i32_0 : i32, i32
  }
  func.func @transform_15(%arg0: i32) -> (i32, i32) {
    %c0_i32 = arith.constant 0 : i32
    %c0_i32_0 = arith.constant 0 : i32
    %c0_i32_1 = arith.constant 0 : i32
    return %c0_i32, %c0_i32_0 : i32, i32
  }
  func.func @transform_16(%arg0: i32) -> (i32, i32, i32) {
    %c0_i32 = arith.constant 0 : i32
    %c0_i32_0 = arith.constant 0 : i32
    %c0_i32_1 = arith.constant 0 : i32
    return %arg0, %c0_i32, %c0_i32_0 : i32, i32, i32
  }
}

</mosaic_0001>

<llo_original>
// kernel: simple_cnn_forward.1
$region0: #{simple_cnn_forward.1}
  #allocation0 [shape = 'u32[]', space=smem, size = 0x4, offset = 0x4, fixed_abs, tag = 'smem constant byte address 0x4 - core index']
  #allocation1 [shape = 'u32[144,128]{1,0:T(1,128)}', space=vmem, size = 0x12000, scoped, tag = 'internal scratch']
  %s0 = inlined_call_operand.vmem [shape: f32[2,4,256], index: 0, kind: input, shape index: {}]
  %s1 = inlined_call_operand.hbm [shape: bf16[25,64,256], index: 1, kind: input, shape index: {}]
  %s2 = inlined_call_operand.vmem [shape: bf16[25,4,32], index: 2, kind: input, shape index: {}]
  %s3 = inlined_call_operand.vmem [shape: f32[1,32], index: 3, kind: input, shape index: {}]
  %s4 = inlined_call_operand.hbm [shape: bf16[25,16,64], index: 4, kind: input, shape index: {}]
  %s5 = inlined_call_operand.hbm [shape: bf16[25,32,64], index: 5, kind: input, shape index: {}]
  %s6 = inlined_call_operand.vmem [shape: f32[1,64], index: 6, kind: input, shape index: {}]
  %s7 = inlined_call_operand.vmem [shape: bf16[25,4,16], index: 7, kind: input, shape index: {}]
  %s8 = inlined_call_operand.hbm [shape: bf16[25,64,128], index: 8, kind: input, shape index: {}]
  %s9 = inlined_call_operand.vmem [shape: f32[1,128], index: 9, kind: input, shape index: {}]
  %s10 = inlined_call_operand.hbm [shape: bf16[4,128,256], index: 10, kind: input, shape index: {}]
  %s11 = inlined_call_operand.vmem [shape: f32[1,256], index: 11, kind: input, shape index: {}]
  %s12 = inlined_call_operand.vmem [shape: bf16[256,256], index: 12, kind: input, shape index: {}]
  %s13 = inlined_call_operand.vmem [shape: f32[1,256], index: 13, kind: input, shape index: {}]
  %s14 = inlined_call_operand.vmem [shape: bf16[256,6], index: 14, kind: input, shape index: {}]
  %s15 = inlined_call_operand.vmem [shape: f32[1,6], index: 15, kind: input, shape index: {}]
  %s16 = inlined_call_operand.hbm [shape: f32[2,1,6], index: 16, kind: output, shape index: {}]
  %s17 = sld [smem:[#allocation0]]
  $region138: #{simple_cnn_forward.1} parent=0
    _
  %s19 = ssub.s32 1, %s17
  %s20 = scalar_select 0, %s19, %s17
  $region1: #{simple_cnn_forward.1} parent=0
    #allocation2 [shape = 'u8[819200]{0}', space=vmem, size = 0xc8000, scoped, tag = 'input window, operand 1, single buffered']
    #allocation3 [shape = 's32[2]{0}', space=sflag, size = 0x8, scoped, tag = 'scoped memory for simple_cnn_forward.1']
    #allocation4 [shape = 's32[2]{0}', space=sflag, size = 0x8, scoped, tag = 'scoped memory for simple_cnn_forward.1']
    #allocation5 [shape = 'u8[102400]{0}', space=vmem, size = 0x19000, scoped, tag = 'input window, operand 4, single buffered']
    #allocation6 [shape = 's32[1]{0}', space=sflag, size = 0x4, scoped, tag = 'scoped memory for simple_cnn_forward.1']
    #allocation7 [shape = 'u8[204800]{0}', space=vmem, size = 0x32000, scoped, tag = 'input window, operand 5, single buffered']
    #allocation8 [shape = 'u8[409600]{0}', space=vmem, size = 0x64000, scoped, tag = 'input window, operand 8, single buffered']
    #allocation9 [shape = 's32[1]{0}', space=sflag, size = 0x4, scoped, tag = 'scoped memory for simple_cnn_forward.1']
    #allocation10 [shape = 'u8[262144]{0}', space=vmem, size = 0x40000, scoped, tag = 'input window, operand 10, single buffered']
    #allocation11 [shape = 'u8[1024]{0}', space=vmem, size = 0x400, scoped, tag = 'output window, operand 0']
    %21 = vsyncpa [#allocation3], 0
    %22 = vsyncpa [#allocation6], 0
    %23 = vsyncpa [#allocation9], 0
    %24 = vsyncpa [#allocation4], 0
    %s25 = scalar_lea.sflag [#allocation4], 1
    %26 = vsyncpa %s25, 0
    loop: start=0, step=1, limit=4
    $region2: #{simple_cnn_forward.1} parent=1 // loop_pre_header
      _
    $region3: #{simple_cnn_forward.1} parent=1 // loop_header
      %s28 = sphi 0, %s32
      %p29 = scmp.ge.s32.totalorder %s28, 4
      %s38 = sphi 0, %s40
      %s41 = sphi 0, %s38
      %s42 = sphi 0, %s41
      %s58 = sphi 0, %s42
      %s62 = sphi 0, %s62
      %s64 = sphi 0, %s62
      %s65 = sphi 0, %s64
      %s79 = sphi 0, %s65
      %s83 = sphi 0, %s83
      %s85 = sphi 0, %s83
      %s86 = sphi 0, %s85
      %s100 = sphi 0, %s86
      %s104 = sphi 0, %s104
      %s106 = sphi 0, %s104
      %s107 = sphi 0, %s106
      %s121 = sphi 0, %s107
      %s125 = sphi 0, %s125
      %s127 = sphi 0, %s125
      %s128 = sphi 0, %s127
      %s142 = sphi 0, %s128
      %s146 = sphi 0, %s146
      %s148 = sphi 0, %s146
      %s149 = sphi 0, %s148
      %s163 = sphi 0, %s149
      %s167 = sphi 0, %s167
      %s169 = sphi 0, %s167
      %s170 = sphi 0, %s169
      %s184 = sphi 0, %s170
      %s188 = sphi 0, %s188
      %s190 = sphi 0, %s188
      %s191 = sphi 0, %s190
      %s205 = sphi 0, %s191
      %s209 = sphi 0, %s209
      %s211 = sphi 0, %s209
      %s212 = sphi 0, %s211
      %s226 = sphi 0, %s212
      %s230 = sphi 0, %s230
      %s232 = sphi 0, %s230
      %s233 = sphi 0, %s232
      %s247 = sphi 0, %s233
      %s251 = sphi 0, %s251
      %s253 = sphi 0, %s251
      %s254 = sphi 0, %s253
      %s268 = sphi 0, %s254
      %s272 = sphi 0, %s272
      %s274 = sphi 0, %s272
      %s275 = sphi 0, %s274
      %s289 = sphi 0, %s275
      %s293 = sphi 0, %s293
      %s295 = sphi 0, %s293
      %s296 = sphi 0, %s295
      %s310 = sphi 0, %s296
      %s314 = sphi 0, %s314
      %s316 = sphi 0, %s314
      %s317 = sphi 0, %s316
      %s331 = sphi 0, %s317
      %s335 = sphi 0, %s335
      %s337 = sphi 0, %s335
      %s338 = sphi 0, %s337
      %s352 = sphi 0, %s338
      %s356 = sphi 0, %s356
      %s358 = sphi 0, %s356
      %s359 = sphi 0, %s358
      %s373 = sphi 0, %s359
      %s379 = sphi 0, %s381
      %s382 = sphi 0, %s379
      %s383 = sphi 0, %s382
      %s399 = sphi 0, %s383
    $region4: #{simple_cnn_forward.1} parent=1 // loop_header_branch
      %31 = sbr.rel (%p29) target = $region8
    $region5: #{simple_cnn_forward.1} parent=1 // loop_body
      %s33 = ssub.s32 %s28, 1
      %s34 = ssub.s32 %s28, 2
      %s35 = sadd.s32 %s28, 1
      %s36 = ssub.s32 %s28, %s35
      %p37 = scmp.eq.s32.totalorder %s36, 0
      %s39 = sadd.s32 %s38, 1
      %s40 = scalar_select %p37, %s38, %s39
      %p43 = pneg %p37
      %p44 = scmp.eq.s32.totalorder %s28, 1
      %p45 = por %p43, %p44
      %p46 = scmp.ne.s32.totalorder %s38, %s41
      %p47 = scmp.eq.s32.totalorder %s28, 0
      %p48 = por %p46, %p47
      %p49 = scmp.ne.s32.totalorder %s38, %s41
      %p50 = scmp.eq.s32.totalorder %s33, 1
      %p51 = por %p49, %p50
      %p52 = scmp.ne.s32.totalorder %s41, %s42
      %p53 = scmp.eq.s32.totalorder %s33, 0
      %p54 = por %p52, %p53
      %p55 = scmp.ne.s32.totalorder %s41, %s42
      %p56 = scmp.eq.s32.totalorder %s34, 1
      %p57 = por %p55, %p56
      %p59 = scmp.ne.s32.totalorder %s42, %s58
      %p60 = scmp.eq.s32.totalorder %s34, 0
      %p61 = por %p59, %p60
      %s63 = sadd.s32 %s62, 1
      %p66 = scmp.eq.s32.totalorder %s28, 1
      %p67 = scmp.ne.s32.totalorder %s62, %s64
      %p68 = scmp.eq.s32.totalorder %s28, 0
      %p69 = por %p67, %p68
      %p70 = scmp.ne.s32.totalorder %s62, %s64
      %p71 = scmp.eq.s32.totalorder %s33, 1
      %p72 = por %p70, %p71
      %p73 = scmp.ne.s32.totalorder %s64, %s65
      %p74 = scmp.eq.s32.totalorder %s33, 0
      %p75 = por %p73, %p74
      %p76 = scmp.ne.s32.totalorder %s64, %s65
      %p77 = scmp.eq.s32.totalorder %s34, 1
      %p78 = por %p76, %p77
      %p80 = scmp.ne.s32.totalorder %s65, %s79
      %p81 = scmp.eq.s32.totalorder %s34, 0
      %p82 = por %p80, %p81
      %s84 = sadd.s32 %s83, 1
      %p87 = scmp.eq.s32.totalorder %s28, 1
      %p88 = scmp.ne.s32.totalorder %s83, %s85
      %p89 = scmp.eq.s32.totalorder %s28, 0
      %p90 = por %p88, %p89
      %p91 = scmp.ne.s32.totalorder %s83, %s85
      %p92 = scmp.eq.s32.totalorder %s33, 1
      %p93 = por %p91, %p92
      %p94 = scmp.ne.s32.totalorder %s85, %s86
      %p95 = scmp.eq.s32.totalorder %s33, 0
      %p96 = por %p94, %p95
      %p97 = scmp.ne.s32.totalorder %s85, %s86
      %p98 = scmp.eq.s32.totalorder %s34, 1
      %p99 = por %p97, %p98
      %p101 = scmp.ne.s32.totalorder %s86, %s100
      %p102 = scmp.eq.s32.totalorder %s34, 0
      %p103 = por %p101, %p102
      %s105 = sadd.s32 %s104, 1
      %p108 = scmp.eq.s32.totalorder %s28, 1
      %p109 = scmp.ne.s32.totalorder %s104, %s106
      %p110 = scmp.eq.s32.totalorder %s28, 0
      %p111 = por %p109, %p110
      %p112 = scmp.ne.s32.totalorder %s104, %s106
      %p113 = scmp.eq.s32.totalorder %s33, 1
      %p114 = por %p112, %p113
      %p115 = scmp.ne.s32.totalorder %s106, %s107
      %p116 = scmp.eq.s32.totalorder %s33, 0
      %p117 = por %p115, %p116
      %p118 = scmp.ne.s32.totalorder %s106, %s107
      %p119 = scmp.eq.s32.totalorder %s34, 1
      %p120 = por %p118, %p119
      %p122 = scmp.ne.s32.totalorder %s107, %s121
      %p123 = scmp.eq.s32.totalorder %s34, 0
      %p124 = por %p122, %p123
      %s126 = sadd.s32 %s125, 1
      %p129 = scmp.eq.s32.totalorder %s28, 1
      %p130 = scmp.ne.s32.totalorder %s125, %s127
      %p131 = scmp.eq.s32.totalorder %s28, 0
      %p132 = por %p130, %p131
      %p133 = scmp.ne.s32.totalorder %s125, %s127
      %p134 = scmp.eq.s32.totalorder %s33, 1
      %p135 = por %p133, %p134
      %p136 = scmp.ne.s32.totalorder %s127, %s128
      %p137 = scmp.eq.s32.totalorder %s33, 0
      %p138 = por %p136, %p137
      %p139 = scmp.ne.s32.totalorder %s127, %s128
      %p140 = scmp.eq.s32.totalorder %s34, 1
      %p141 = por %p139, %p140
      %p143 = scmp.ne.s32.totalorder %s128, %s142
      %p144 = scmp.eq.s32.totalorder %s34, 0
      %p145 = por %p143, %p144
      %s147 = sadd.s32 %s146, 1
      %p150 = scmp.eq.s32.totalorder %s28, 1
      %p151 = scmp.ne.s32.totalorder %s146, %s148
      %p152 = scmp.eq.s32.totalorder %s28, 0
      %p153 = por %p151, %p152
      %p154 = scmp.ne.s32.totalorder %s146, %s148
      %p155 = scmp.eq.s32.totalorder %s33, 1
      %p156 = por %p154, %p155
      %p157 = scmp.ne.s32.totalorder %s148, %s149
      %p158 = scmp.eq.s32.totalorder %s33, 0
      %p159 = por %p157, %p158
      %p160 = scmp.ne.s32.totalorder %s148, %s149
      %p161 = scmp.eq.s32.totalorder %s34, 1
      %p162 = por %p160, %p161
      %p164 = scmp.ne.s32.totalorder %s149, %s163
      %p165 = scmp.eq.s32.totalorder %s34, 0
      %p166 = por %p164, %p165
      %s168 = sadd.s32 %s167, 1
      %p171 = scmp.eq.s32.totalorder %s28, 1
      %p172 = scmp.ne.s32.totalorder %s167, %s169
      %p173 = scmp.eq.s32.totalorder %s28, 0
      %p174 = por %p172, %p173
      %p175 = scmp.ne.s32.totalorder %s167, %s169
      %p176 = scmp.eq.s32.totalorder %s33, 1
      %p177 = por %p175, %p176
      %p178 = scmp.ne.s32.totalorder %s169, %s170
      %p179 = scmp.eq.s32.totalorder %s33, 0
      %p180 = por %p178, %p179
      %p181 = scmp.ne.s32.totalorder %s169, %s170
      %p182 = scmp.eq.s32.totalorder %s34, 1
      %p183 = por %p181, %p182
      %p185 = scmp.ne.s32.totalorder %s170, %s184
      %p186 = scmp.eq.s32.totalorder %s34, 0
      %p187 = por %p185, %p186
      %s189 = sadd.s32 %s188, 1
      %p192 = scmp.eq.s32.totalorder %s28, 1
      %p193 = scmp.ne.s32.totalorder %s188, %s190
      %p194 = scmp.eq.s32.totalorder %s28, 0
      %p195 = por %p193, %p194
      %p196 = scmp.ne.s32.totalorder %s188, %s190
      %p197 = scmp.eq.s32.totalorder %s33, 1
      %p198 = por %p196, %p197
      %p199 = scmp.ne.s32.totalorder %s190, %s191
      %p200 = scmp.eq.s32.totalorder %s33, 0
      %p201 = por %p199, %p200
      %p202 = scmp.ne.s32.totalorder %s190, %s191
      %p203 = scmp.eq.s32.totalorder %s34, 1
      %p204 = por %p202, %p203
      %p206 = scmp.ne.s32.totalorder %s191, %s205
      %p207 = scmp.eq.s32.totalorder %s34, 0
      %p208 = por %p206, %p207
      %s210 = sadd.s32 %s209, 1
      %p213 = scmp.eq.s32.totalorder %s28, 1
      %p214 = scmp.ne.s32.totalorder %s209, %s211
      %p215 = scmp.eq.s32.totalorder %s28, 0
      %p216 = por %p214, %p215
      %p217 = scmp.ne.s32.totalorder %s209, %s211
      %p218 = scmp.eq.s32.totalorder %s33, 1
      %p219 = por %p217, %p218
      %p220 = scmp.ne.s32.totalorder %s211, %s212
      %p221 = scmp.eq.s32.totalorder %s33, 0
      %p222 = por %p220, %p221
      %p223 = scmp.ne.s32.totalorder %s211, %s212
      %p224 = scmp.eq.s32.totalorder %s34, 1
      %p225 = por %p223, %p224
      %p227 = scmp.ne.s32.totalorder %s212, %s226
      %p228 = scmp.eq.s32.totalorder %s34, 0
      %p229 = por %p227, %p228
      %s231 = sadd.s32 %s230, 1
      %p234 = scmp.eq.s32.totalorder %s28, 1
      %p235 = scmp.ne.s32.totalorder %s230, %s232
      %p236 = scmp.eq.s32.totalorder %s28, 0
      %p237 = por %p235, %p236
      %p238 = scmp.ne.s32.totalorder %s230, %s232
      %p239 = scmp.eq.s32.totalorder %s33, 1
      %p240 = por %p238, %p239
      %p241 = scmp.ne.s32.totalorder %s232, %s233
      %p242 = scmp.eq.s32.totalorder %s33, 0
      %p243 = por %p241, %p242
      %p244 = scmp.ne.s32.totalorder %s232, %s233
      %p245 = scmp.eq.s32.totalorder %s34, 1
      %p246 = por %p244, %p245
      %p248 = scmp.ne.s32.totalorder %s233, %s247
      %p249 = scmp.eq.s32.totalorder %s34, 0
      %p250 = por %p248, %p249
      %s252 = sadd.s32 %s251, 1
      %p255 = scmp.eq.s32.totalorder %s28, 1
      %p256 = scmp.ne.s32.totalorder %s251, %s253
      %p257 = scmp.eq.s32.totalorder %s28, 0
      %p258 = por %p256, %p257
      %p259 = scmp.ne.s32.totalorder %s251, %s253
      %p260 = scmp.eq.s32.totalorder %s33, 1
      %p261 = por %p259, %p260
      %p262 = scmp.ne.s32.totalorder %s253, %s254
      %p263 = scmp.eq.s32.totalorder %s33, 0
      %p264 = por %p262, %p263
      %p265 = scmp.ne.s32.totalorder %s253, %s254
      %p266 = scmp.eq.s32.totalorder %s34, 1
      %p267 = por %p265, %p266
      %p269 = scmp.ne.s32.totalorder %s254, %s268
      %p270 = scmp.eq.s32.totalorder %s34, 0
      %p271 = por %p269, %p270
      %s273 = sadd.s32 %s272, 1
      %p276 = scmp.eq.s32.totalorder %s28, 1
      %p277 = scmp.ne.s32.totalorder %s272, %s274
      %p278 = scmp.eq.s32.totalorder %s28, 0
      %p279 = por %p277, %p278
      %p280 = scmp.ne.s32.totalorder %s272, %s274
      %p281 = scmp.eq.s32.totalorder %s33, 1
      %p282 = por %p280, %p281
      %p283 = scmp.ne.s32.totalorder %s274, %s275
      %p284 = scmp.eq.s32.totalorder %s33, 0
      %p285 = por %p283, %p284
      %p286 = scmp.ne.s32.totalorder %s274, %s275
      %p287 = scmp.eq.s32.totalorder %s34, 1
      %p288 = por %p286, %p287
      %p290 = scmp.ne.s32.totalorder %s275, %s289
      %p291 = scmp.eq.s32.totalorder %s34, 0
      %p292 = por %p290, %p291
      %s294 = sadd.s32 %s293, 1
      %p297 = scmp.eq.s32.totalorder %s28, 1
      %p298 = scmp.ne.s32.totalorder %s293, %s295
      %p299 = scmp.eq.s32.totalorder %s28, 0
      %p300 = por %p298, %p299
      %p301 = scmp.ne.s32.totalorder %s293, %s295
      %p302 = scmp.eq.s32.totalorder %s33, 1
      %p303 = por %p301, %p302
      %p304 = scmp.ne.s32.totalorder %s295, %s296
      %p305 = scmp.eq.s32.totalorder %s33, 0
      %p306 = por %p304, %p305
      %p307 = scmp.ne.s32.totalorder %s295, %s296
      %p308 = scmp.eq.s32.totalorder %s34, 1
      %p309 = por %p307, %p308
      %p311 = scmp.ne.s32.totalorder %s296, %s310
      %p312 = scmp.eq.s32.totalorder %s34, 0
      %p313 = por %p311, %p312
      %s315 = sadd.s32 %s314, 1
      %p318 = scmp.eq.s32.totalorder %s28, 1
      %p319 = scmp.ne.s32.totalorder %s314, %s316
      %p320 = scmp.eq.s32.totalorder %s28, 0
      %p321 = por %p319, %p320
      %p322 = scmp.ne.s32.totalorder %s314, %s316
      %p323 = scmp.eq.s32.totalorder %s33, 1
      %p324 = por %p322, %p323
      %p325 = scmp.ne.s32.totalorder %s316, %s317
      %p326 = scmp.eq.s32.totalorder %s33, 0
      %p327 = por %p325, %p326
      %p328 = scmp.ne.s32.totalorder %s316, %s317
      %p329 = scmp.eq.s32.totalorder %s34, 1
      %p330 = por %p328, %p329
      %p332 = scmp.ne.s32.totalorder %s317, %s331
      %p333 = scmp.eq.s32.totalorder %s34, 0
      %p334 = por %p332, %p333
      %s336 = sadd.s32 %s335, 1
      %p339 = scmp.eq.s32.totalorder %s28, 1
      %p340 = scmp.ne.s32.totalorder %s335, %s337
      %p341 = scmp.eq.s32.totalorder %s28, 0
      %p342 = por %p340, %p341
      %p343 = scmp.ne.s32.totalorder %s335, %s337
      %p344 = scmp.eq.s32.totalorder %s33, 1
      %p345 = por %p343, %p344
      %p346 = scmp.ne.s32.totalorder %s337, %s338
      %p347 = scmp.eq.s32.totalorder %s33, 0
      %p348 = por %p346, %p347
      %p349 = scmp.ne.s32.totalorder %s337, %s338
      %p350 = scmp.eq.s32.totalorder %s34, 1
      %p351 = por %p349, %p350
      %p353 = scmp.ne.s32.totalorder %s338, %s352
      %p354 = scmp.eq.s32.totalorder %s34, 0
      %p355 = por %p353, %p354
      %s357 = sadd.s32 %s356, 1
      %p360 = scmp.eq.s32.totalorder %s28, 1
      %p361 = scmp.ne.s32.totalorder %s356, %s358
      %p362 = scmp.eq.s32.totalorder %s28, 0
      %p363 = por %p361, %p362
      %p364 = scmp.ne.s32.totalorder %s356, %s358
      %p365 = scmp.eq.s32.totalorder %s33, 1
      %p366 = por %p364, %p365
      %p367 = scmp.ne.s32.totalorder %s358, %s359
      %p368 = scmp.eq.s32.totalorder %s33, 0
      %p369 = por %p367, %p368
      %p370 = scmp.ne.s32.totalorder %s358, %s359
      %p371 = scmp.eq.s32.totalorder %s34, 1
      %p372 = por %p370, %p371
      %p374 = scmp.ne.s32.totalorder %s359, %s373
      %p375 = scmp.eq.s32.totalorder %s34, 0
      %p376 = por %p374, %p375
      %s377 = ssub.s32 %s28, %s35
      %p378 = scmp.eq.s32.totalorder %s377, 0
      %s380 = sadd.s32 %s379, 1
      %s381 = scalar_select %p378, %s379, %s380
      %p384 = pneg %p378
      %p385 = scmp.eq.s32.totalorder %s28, 1
      %p386 = por %p384, %p385
      %p387 = scmp.ne.s32.totalorder %s379, %s382
      %p388 = scmp.eq.s32.totalorder %s28, 0
      %p389 = por %p387, %p388
      %p390 = scmp.ne.s32.totalorder %s379, %s382
      %p391 = scmp.eq.s32.totalorder %s33, 1
      %p392 = por %p390, %p391
      %p393 = scmp.ne.s32.totalorder %s382, %s383
      %p394 = scmp.eq.s32.totalorder %s33, 0
      %p395 = por %p393, %p394
      %p396 = scmp.ne.s32.totalorder %s382, %s383
      %p397 = scmp.eq.s32.totalorder %s34, 1
      %p398 = por %p396, %p397
      %p400 = scmp.ne.s32.totalorder %s383, %s399
      %p401 = scmp.eq.s32.totalorder %s34, 0
      %p402 = por %p400, %p401
      %p403 = scmp.le.s32.totalorder 1, %s28
      %p404 = scmp.lt.s32.totalorder %s28, 3
      %p405 = pnand %p403, %p404
      %p406 = pneg %p405
      // Predicated region
      $region9: #{simple_cnn_forward.1} parent=5 // pred_check
        _
      $region10: #{simple_cnn_forward.1} parent=5 // pred_check_branch
        %408 = sbr.rel (%p405) target = $region12
      $region11: #{simple_cnn_forward.1} parent=5 // pred_region
        %s409 = ssub.s32 %s28, 1
        // Predicated region
        $region13: #{simple_cnn_forward.1} parent=11 // pred_check
          %p410 = pneg %p75
        $region14: #{simple_cnn_forward.1} parent=11 // pred_check_branch
          %412 = sbr.rel (%p410) target = $region16
        $region15: #{simple_cnn_forward.1} parent=11 // pred_region
          %s414 = ssub.s32 25600, 25600
          %415 = vsyncadd [#allocation3], %s414
          %s416 = sshll.u32 [#allocation2], 4
          %s417 = int_to_ptr.vmem [resolvable:$true] %s416
          %422 = dma.hbm_to_vmem [thread:$0]  %s1, 25600, %s417, [#allocation3], 128, 128, 8
        $region16: #{simple_cnn_forward.1} parent=11 // pred_fallthru
          _
        // Predicated region
        $region17: #{simple_cnn_forward.1} parent=11 // pred_check
          %p423 = pneg %p96
        $region18: #{simple_cnn_forward.1} parent=11 // pred_check_branch
          %425 = sbr.rel (%p423) target = $region20
        $region19: #{simple_cnn_forward.1} parent=11 // pred_region
          _
        $region20: #{simple_cnn_forward.1} parent=11 // pred_fallthru
          _
        // Predicated region
        $region21: #{simple_cnn_forward.1} parent=11 // pred_check
          %p426 = pneg %p117
        $region22: #{simple_cnn_forward.1} parent=11 // pred_check_branch
          %428 = sbr.rel (%p426) target = $region24
        $region23: #{simple_cnn_forward.1} parent=11 // pred_region
          _
        $region24: #{simple_cnn_forward.1} parent=11 // pred_fallthru
          _
        // Predicated region
        $region25: #{simple_cnn_forward.1} parent=11 // pred_check
          %p429 = pneg %p138
        $region26: #{simple_cnn_forward.1} parent=11 // pred_check_branch
          %431 = sbr.rel (%p429) target = $region28
        $region27: #{simple_cnn_forward.1} parent=11 // pred_region
          %s433 = ssub.s32 3200, 3200
          %434 = vsyncadd [#allocation6], %s433
          %s435 = sshll.u32 [#allocation5], 4
          %s436 = int_to_ptr.vmem [resolvable:$true] %s435
          %441 = dma.hbm_to_vmem [thread:$0]  %s4, 3200, %s436, [#allocation6], 64, 64, 4
        $region28: #{simple_cnn_forward.1} parent=11 // pred_fallthru
          _
        // Predicated region
        $region29: #{simple_cnn_forward.1} parent=11 // pred_check
          %p442 = pneg %p159
        $region30: #{simple_cnn_forward.1} parent=11 // pred_check_branch
          %444 = sbr.rel (%p442) target = $region32
        $region31: #{simple_cnn_forward.1} parent=11 // pred_region
          %s446 = ssub.s32 6400, 6400
          %447 = vsyncadd [#allocation6], %s446
          %s448 = sshll.u32 [#allocation7], 4
          %s449 = int_to_ptr.vmem [resolvable:$true] %s448
          %454 = dma.hbm_to_vmem [thread:$0]  %s5, 6400, %s449, [#allocation6], 64, 64, 4
        $region32: #{simple_cnn_forward.1} parent=11 // pred_fallthru
          _
        // Predicated region
        $region33: #{simple_cnn_forward.1} parent=11 // pred_check
          %p455 = pneg %p180
        $region34: #{simple_cnn_forward.1} parent=11 // pred_check_branch
          %457 = sbr.rel (%p455) target = $region36
        $region35: #{simple_cnn_forward.1} parent=11 // pred_region
          _
        $region36: #{simple_cnn_forward.1} parent=11 // pred_fallthru
          _
        // Predicated region
        $region37: #{simple_cnn_forward.1} parent=11 // pred_check
          %p458 = pneg %p201
        $region38: #{simple_cnn_forward.1} parent=11 // pred_check_branch
          %460 = sbr.rel (%p458) target = $region40
        $region39: #{simple_cnn_forward.1} parent=11 // pred_region
          _
        $region40: #{simple_cnn_forward.1} parent=11 // pred_fallthru
          _
        // Predicated region
        $region41: #{simple_cnn_forward.1} parent=11 // pred_check
          %p461 = pneg %p222
        $region42: #{simple_cnn_forward.1} parent=11 // pred_check_branch
          %463 = sbr.rel (%p461) target = $region44
        $region43: #{simple_cnn_forward.1} parent=11 // pred_region
          %s465 = ssub.s32 12800, 12800
          %466 = vsyncadd [#allocation9], %s465
          %s467 = sshll.u32 [#allocation8], 4
          %s468 = int_to_ptr.vmem [resolvable:$true] %s467
          %473 = dma.hbm_to_vmem [thread:$0]  %s8, 12800, %s468, [#allocation9], 64, 64, 4
        $region44: #{simple_cnn_forward.1} parent=11 // pred_fallthru
          _
        // Predicated region
        $region45: #{simple_cnn_forward.1} parent=11 // pred_check
          %p474 = pneg %p243
        $region46: #{simple_cnn_forward.1} parent=11 // pred_check_branch
          %476 = sbr.rel (%p474) target = $region48
        $region47: #{simple_cnn_forward.1} parent=11 // pred_region
          _
        $region48: #{simple_cnn_forward.1} parent=11 // pred_fallthru
          _
        // Predicated region
        $region49: #{simple_cnn_forward.1} parent=11 // pred_check
          %p477 = pneg %p264
        $region50: #{simple_cnn_forward.1} parent=11 // pred_check_branch
          %479 = sbr.rel (%p477) target = $region52
        $region51: #{simple_cnn_forward.1} parent=11 // pred_region
          %s481 = ssub.s32 8192, 8192
          %482 = vsyncadd [#allocation9], %s481
          %s483 = sshll.u32 [#allocation10], 4
          %s484 = int_to_ptr.vmem [resolvable:$true] %s483
          %489 = dma.hbm_to_vmem [thread:$0]  %s10, 8192, %s484, [#allocation9], 128, 128, 8
        $region52: #{simple_cnn_forward.1} parent=11 // pred_fallthru
          _
        // Predicated region
        $region53: #{simple_cnn_forward.1} parent=11 // pred_check
          %p490 = pneg %p285
        $region54: #{simple_cnn_forward.1} parent=11 // pred_check_branch
          %492 = sbr.rel (%p490) target = $region56
        $region55: #{simple_cnn_forward.1} parent=11 // pred_region
          _
        $region56: #{simple_cnn_forward.1} parent=11 // pred_fallthru
          _
        // Predicated region
        $region57: #{simple_cnn_forward.1} parent=11 // pred_check
          %p493 = pneg %p306
        $region58: #{simple_cnn_forward.1} parent=11 // pred_check_branch
          %495 = sbr.rel (%p493) target = $region60
        $region59: #{simple_cnn_forward.1} parent=11 // pred_region
          _
        $region60: #{simple_cnn_forward.1} parent=11 // pred_fallthru
          _
        // Predicated region
        $region61: #{simple_cnn_forward.1} parent=11 // pred_check
          %p496 = pneg %p327
        $region62: #{simple_cnn_forward.1} parent=11 // pred_check_branch
          %498 = sbr.rel (%p496) target = $region64
        $region63: #{simple_cnn_forward.1} parent=11 // pred_region
          _
        $region64: #{simple_cnn_forward.1} parent=11 // pred_fallthru
          _
        // Predicated region
        $region65: #{simple_cnn_forward.1} parent=11 // pred_check
          %p499 = pneg %p348
        $region66: #{simple_cnn_forward.1} parent=11 // pred_check_branch
          %501 = sbr.rel (%p499) target = $region68
        $region67: #{simple_cnn_forward.1} parent=11 // pred_region
          _
        $region68: #{simple_cnn_forward.1} parent=11 // pred_fallthru
          _
        // Predicated region
        $region69: #{simple_cnn_forward.1} parent=11 // pred_check
          %p502 = pneg %p369
        $region70: #{simple_cnn_forward.1} parent=11 // pred_check_branch
          %504 = sbr.rel (%p502) target = $region72
        $region71: #{simple_cnn_forward.1} parent=11 // pred_region
          _
        $region72: #{simple_cnn_forward.1} parent=11 // pred_fallthru
          _
      $region12: #{simple_cnn_forward.1} parent=5 // pred_fallthru
        _
      %p505 = scmp.lt.s32.totalorder %s28, 2
      // Predicated region
      $region73: #{simple_cnn_forward.1} parent=5 // pred_check
        %p506 = pneg %p505
      $region74: #{simple_cnn_forward.1} parent=5 // pred_check_branch
        %508 = sbr.rel (%p506) target = $region76
      $region75: #{simple_cnn_forward.1} parent=5 // pred_region
        // Predicated region
        $region77: #{simple_cnn_forward.1} parent=75 // pred_check
          %p509 = pneg %p48
        $region78: #{simple_cnn_forward.1} parent=75 // pred_check_branch
          %511 = sbr.rel (%p509) target = $region80
        $region79: #{simple_cnn_forward.1} parent=75 // pred_region
          %p512 = scmp.lt.s32.totalorder %s28, 1
          %s513 = scalar_select %p512, %s28, 1
          %s514 = smul.addr %s513, 2
          %s515 = smul.addr %s514, 4
          %s516 = scalar_lea.vmem %s0, %s515
        $region80: #{simple_cnn_forward.1} parent=75 // pred_fallthru
          _
      $region76: #{simple_cnn_forward.1} parent=5 // pred_fallthru
        _
      %p517 = scmp.le.s32.totalorder 1, %s28
      %p518 = scmp.lt.s32.totalorder %s28, 3
      %p519 = pnand %p517, %p518
      %p520 = pneg %p519
      // Predicated region
      $region81: #{simple_cnn_forward.1} parent=5 // pred_check
        _
      $region82: #{simple_cnn_forward.1} parent=5 // pred_check_branch
        %522 = sbr.rel (%p519) target = $region84
      $region83: #{simple_cnn_forward.1} parent=5 // pred_region
        %s523 = ssub.s32 %s28, 1
        // Predicated region
        $region85: #{simple_cnn_forward.1} parent=83 // pred_check
          %p524 = pneg %p75
        $region86: #{simple_cnn_forward.1} parent=83 // pred_check_branch
          %526 = sbr.rel (%p524) target = $region88
        $region87: #{simple_cnn_forward.1} parent=83 // pred_region
          %527 = dma.done [#allocation3], 25600
        $region88: #{simple_cnn_forward.1} parent=83 // pred_fallthru
          _
        // Predicated region
        $region89: #{simple_cnn_forward.1} parent=83 // pred_check
          %p528 = pneg %p138
        $region90: #{simple_cnn_forward.1} parent=83 // pred_check_branch
          %530 = sbr.rel (%p528) target = $region92
        $region91: #{simple_cnn_forward.1} parent=83 // pred_region
          %531 = dma.done [#allocation6], 3200
        $region92: #{simple_cnn_forward.1} parent=83 // pred_fallthru
          _
        // Predicated region
        $region93: #{simple_cnn_forward.1} parent=83 // pred_check
          %p532 = pneg %p159
        $region94: #{simple_cnn_forward.1} parent=83 // pred_check_branch
          %534 = sbr.rel (%p532) target = $region96
        $region95: #{simple_cnn_forward.1} parent=83 // pred_region
          %535 = dma.done [#allocation6], 6400
        $region96: #{simple_cnn_forward.1} parent=83 // pred_fallthru
          _
        // Predicated region
        $region97: #{simple_cnn_forward.1} parent=83 // pred_check
          %p536 = pneg %p222
        $region98: #{simple_cnn_forward.1} parent=83 // pred_check_branch
          %538 = sbr.rel (%p536) target = $region100
        $region99: #{simple_cnn_forward.1} parent=83 // pred_region
          %539 = dma.done [#allocation9], 12800
        $region100: #{simple_cnn_forward.1} parent=83 // pred_fallthru
          _
        // Predicated region
        $region101: #{simple_cnn_forward.1} parent=83 // pred_check
          %p540 = pneg %p264
        $region102: #{simple_cnn_forward.1} parent=83 // pred_check_branch
          %542 = sbr.rel (%p540) target = $region104
        $region103: #{simple_cnn_forward.1} parent=83 // pred_region
          %543 = dma.done [#allocation9], 8192
        $region104: #{simple_cnn_forward.1} parent=83 // pred_fallthru
          _
        %p544 = scmp.lt.s32.totalorder %s33, 1
        %s545 = scalar_select %p544, %s33, 1
        %s546 = smul.addr %s545, 2
        %s547 = smul.addr %s546, 4
        %s548 = scalar_lea.vmem %s0, %s547
        %p549 = pneg %p54
        %p550 = pneg %p51
        %p551 = pneg %p75
        %p552 = pneg %p72
        %p553 = pneg %p96
        %p554 = pneg %p93
        %p555 = pneg %p117
        %p556 = pneg %p114
        %p557 = pneg %p138
        %p558 = pneg %p135
        %p559 = pneg %p159
        %p560 = pneg %p156
        %p561 = pneg %p180
        %p562 = pneg %p177
        %p563 = pneg %p201
        %p564 = pneg %p198
        %p565 = pneg %p222
        %p566 = pneg %p219
        %p567 = pneg %p243
        %p568 = pneg %p240
        %p569 = pneg %p264
        %p570 = pneg %p261
        %p571 = pneg %p285
        %p572 = pneg %p282
        %p573 = pneg %p306
        %p574 = pneg %p303
        %p575 = pneg %p327
        %p576 = pneg %p324
        %p577 = pneg %p348
        %p578 = pneg %p345
        %p579 = pneg %p369
        %p580 = pneg %p366
        %p581 = pneg %p395
        %p582 = pneg %p392
        %s583 = sand.u32 %s382, 1
        %s584 = scalar_lea.sflag [#allocation4], %s583
        %s585 = sand.u32 %s382, 1
        %s586 = scalar_lea.vmem [#allocation11], %s585
        %p587 = scmp.lt.s32.totalorder %s33, 1
        %s588 = scalar_select %p587, %s33, 1
        %s589 = smul.addr %s588, 2
        %s590 = smul.addr %s589, 4
        %s591 = scalar_lea.vmem %s0, %s590
        %v593 = vld [vmem:[%s591] sm:$0xff]
        %v595 = vcombine.high %v593, %v593
        %v597 = vpack.c.bf16 %v593, %v593
        %v598 = vpack.c.bf16 %v595, %v595
        loop: start=0, step=1, limit=25
        $region105: #{simple_cnn_forward.1} parent=83 // loop_pre_header
          _
        $region106: #{simple_cnn_forward.1} parent=83 // loop_header
          %s600 = sphi 0, %s604
          %p601 = scmp.ge.s32.totalorder %s600, 25
          %v605 = vphi 0.0, %v818
          %v606 = vphi 0.0, %v819
          %v607 = vphi 0.0, %v820
          %v608 = vphi 0.0, %v821
          %v609 = vphi 0.0, %v822
          %v610 = vphi 0.0, %v823
          %v611 = vphi 0.0, %v824
          %v612 = vphi 0.0, %v825
        $region107: #{simple_cnn_forward.1} parent=83 // loop_header_branch
          %603 = sbr.rel (%p601) target = $region111
        $region108: #{simple_cnn_forward.1} parent=83 // loop_body
          %s613 = smul.u32 %s600, 16
          %s614 = smul.addr %s613, 4
          %s615 = scalar_lea.vmem [#allocation2], %s614
          %v616 = vld [vmem:[%s615] sm:$0xff]
          %v617 = vld [vmem:[%s615 + $0x8] sm:$0xff]
          %v618 = vld [vmem:[%s615 + $0x10] sm:$0xff]
          %v619 = vld [vmem:[%s615 + $0x18] sm:$0xff]
          %v620 = vld [vmem:[%s615 + $0x20] sm:$0xff]
          %v621 = vld [vmem:[%s615 + $0x28] sm:$0xff]
          %v622 = vld [vmem:[%s615 + $0x30] sm:$0xff]
          %v623 = vld [vmem:[%s615 + $0x38] sm:$0xff]
          %v632 = vunpack.c.l.b16 %v616
          %v633 = vunpack.c.h.b16 %v616
          %v634 = vunpack.c.l.b16 %v617
          %v635 = vunpack.c.h.b16 %v617
          %v636 = vunpack.c.l.b16 %v618
          %v637 = vunpack.c.h.b16 %v618
          %v638 = vunpack.c.l.b16 %v619
          %v639 = vunpack.c.h.b16 %v619
          %v640 = vunpack.c.l.b16 %v620
          %v641 = vunpack.c.h.b16 %v620
          %v642 = vunpack.c.l.b16 %v621
          %v643 = vunpack.c.h.b16 %v621
          %v644 = vunpack.c.l.b16 %v622
          %v645 = vunpack.c.h.b16 %v622
          %v646 = vunpack.c.l.b16 %v623
          %v647 = vunpack.c.h.b16 %v623
          %v648 = vpack.c.b16 %v634, %v632
          %v649 = vpack.c.b16 %v635, %v633
          %v650 = vpack.c.b16 %v638, %v636
          %v651 = vpack.c.b16 %v639, %v637
          %v652 = vpack.c.b16 %v642, %v640
          %v653 = vpack.c.b16 %v643, %v641
          %v654 = vpack.c.b16 %v646, %v644
          %v655 = vpack.c.b16 %v647, %v645
          %664 = vmatprep.subr.bf16.mxu0 %v598
          %665 = vmatpush1.bf16.xpose.msra.mxu0 %v597
          %666 = vmatprep.subr.bf16.mxu0 0
          %667 = vmatpush1.bf16.xpose.msra.mxu0 0
          %668 = vmatprep.subr.bf16.mxu0 0
          %669 = vmatpush1.bf16.xpose.msra.mxu0 0
          %670 = vmatprep.subr.bf16.mxu0 0
          %671 = vmatpush1.bf16.xpose.msra.mxu0 0
          %672 = vmatprep.subr.bf16.mxu0 0
          %673 = vmatpush1.bf16.xpose.msra.mxu0 0
          %674 = vmatprep.subr.bf16.mxu0 0
          %675 = vmatpush1.bf16.xpose.msra.mxu0 0
          %676 = vmatprep.subr.bf16.mxu0 0
          %677 = vmatpush1.bf16.xpose.msra.mxu0 0
          %678 = vmatprep.subr.bf16.mxu0 0
          %679 = vmatpush1.bf16.xpose.msra.mxu0 0
          %680 = vmatprep.subr.bf16.mxu0 0
          %681 = vmatpush1.bf16.xpose.msra.mxu0 0
          %682 = vmatprep.subr.bf16.mxu0 0
          %683 = vmatpush1.bf16.xpose.msra.mxu0 0
          %684 = vmatprep.subr.bf16.mxu0 0
          %685 = vmatpush1.bf16.xpose.msra.mxu0 0
          %686 = vmatprep.subr.bf16.mxu0 0
          %687 = vmatpush1.bf16.xpose.msra.mxu0 0
          %688 = vmatprep.subr.bf16.mxu0 0
          %689 = vmatpush1.bf16.xpose.msra.mxu0 0
          %690 = vmatprep.subr.bf16.mxu0 0
          %691 = vmatpush1.bf16.xpose.msra.mxu0 0
          %692 = vmatprep.subr.bf16.mxu0 0
          %693 = vmatpush1.bf16.xpose.msra.mxu0 0
          %694 = vmatprep.subr.bf16.mxu0 0
          %695 = vmatpush1.bf16.xpose.msra.mxu0 0
          %696 = vmatprep.mubr.bf16.mxu0 %v649
          %697 = vmatmul.mubr.bf16.gmra.mrb[0].mxu0 %v648
          %v698 = vpop.f32.mrb[0].mxu0
          %v699 = vadd.f32 0.0, %v698
          %v700 = vpop.f32.mrb[0].mxu0
          %v701 = vpop.f32.mrb[0].mxu0
          %v702 = vadd.f32 0.0, %v701
          %v703 = vpop.f32.mrb[0].mxu0
          %704 = vmatprep.mubr.bf16.mxu0 %v651
          %705 = vmatmul.mubr.bf16.gmra.mrb[0].mxu0 %v650
          %v706 = vpop.f32.mrb[0].mxu0
          %v707 = vadd.f32 0.0, %v706
          %v708 = vpop.f32.mrb[0].mxu0
          %v709 = vpop.f32.mrb[0].mxu0
          %v710 = vadd.f32 0.0, %v709
          %v711 = vpop.f32.mrb[0].mxu0
          %712 = vmatprep.mubr.bf16.mxu0 %v653
          %713 = vmatmul.mubr.bf16.gmra.mrb[0].mxu0 %v652
          %v714 = vpop.f32.mrb[0].mxu0
          %v715 = vadd.f32 0.0, %v714
          %v716 = vpop.f32.mrb[0].mxu0
          %v717 = vpop.f32.mrb[0].mxu0
          %v718 = vadd.f32 0.0, %v717
          %v719 = vpop.f32.mrb[0].mxu0
          %720 = vmatprep.mubr.bf16.mxu0 %v655
          %721 = vmatmul.mubr.bf16.gmra.mrb[0].mxu0 %v654
          %v722 = vpop.f32.mrb[0].mxu0
          %v723 = vadd.f32 0.0, %v722
          %v724 = vpop.f32.mrb[0].mxu0
          %v725 = vpop.f32.mrb[0].mxu0
          %v726 = vadd.f32 0.0, %v725
          %v727 = vpop.f32.mrb[0].mxu0
          %728 = vdwg.mxu0
          %v729 = vpack.c.bf16 %v702, %v699
          %v730 = vpack.c.bf16 %v710, %v707
          %v731 = vpack.c.bf16 %v718, %v715
          %v732 = vpack.c.bf16 %v726, %v723
          %s733 = smul.addr %s600, 2
          %s734 = scalar_lea.vmem %s2, %s733
          %v735 = vld [vmem:[%s734] sm:$0x3]
          %vm736 = vcmask 31744
          %v738 = vsel %vm736, %v729, 0
          %v741 = vsel %vm736, %v730, 0
          %v744 = vsel %vm736, %v731, 0
          %v747 = vsel %vm736, %v732, 0
          %vm749 = vcmask 1041408
          %v751 = vsel %vm749, %v735, 0
          %753 = vmatprep.subr.bf16.mxu0 0
          %754 = vmatpush1.bf16.msra.mxu0 %v751
          %755 = vmatprep.subr.bf16.mxu0 0
          %756 = vmatpush1.bf16.msra.mxu0 0
          %757 = vmatprep.subr.bf16.mxu0 0
          %758 = vmatpush1.bf16.msra.mxu0 0
          %759 = vmatprep.subr.bf16.mxu0 0
          %760 = vmatpush1.bf16.msra.mxu0 0
          %761 = vmatprep.subr.bf16.mxu0 0
          %762 = vmatpush1.bf16.msra.mxu0 0
          %763 = vmatprep.subr.bf16.mxu0 0
          %764 = vmatpush1.bf16.msra.mxu0 0
          %765 = vmatprep.subr.bf16.mxu0 0
          %766 = vmatpush1.bf16.msra.mxu0 0
          %767 = vmatprep.subr.bf16.mxu0 0
          %768 = vmatpush1.bf16.msra.mxu0 0
          %769 = vmatprep.subr.bf16.mxu0 0
          %770 = vmatpush1.bf16.msra.mxu0 0
          %771 = vmatprep.subr.bf16.mxu0 0
          %772 = vmatpush1.bf16.msra.mxu0 0
          %773 = vmatprep.subr.bf16.mxu0 0
          %774 = vmatpush1.bf16.msra.mxu0 0
          %775 = vmatprep.subr.bf16.mxu0 0
          %776 = vmatpush1.bf16.msra.mxu0 0
          %777 = vmatprep.subr.bf16.mxu0 0
          %778 = vmatpush1.bf16.msra.mxu0 0
          %779 = vmatprep.subr.bf16.mxu0 0
          %780 = vmatpush1.bf16.msra.mxu0 0
          %781 = vmatprep.subr.bf16.mxu0 0
          %782 = vmatpush1.bf16.msra.mxu0 0
          %783 = vmatprep.subr.bf16.mxu0 0
          %784 = vmatpush1.bf16.msra.mxu0 0
          %785 = vmatprep.mubr.bf16.mxu0 0
          %786 = vmatmul.mubr.bf16.gmra.mrb[0].mxu0 %v738
          %v787 = vpop.f32.mrb[0].mxu0
          %v788 = vadd.f32 0.0, %v787
          %v789 = vpop.f32.mrb[0].mxu0
          %v790 = vpop.f32.mrb[0].mxu0
          %v791 = vadd.f32 0.0, %v790
          %v792 = vpop.f32.mrb[0].mxu0
          %793 = vmatprep.mubr.bf16.mxu0 0
          %794 = vmatmul.mubr.bf16.gmra.mrb[0].mxu0 %v741
          %v795 = vpop.f32.mrb[0].mxu0
          %v796 = vadd.f32 0.0, %v795
          %v797 = vpop.f32.mrb[0].mxu0
          %v798 = vpop.f32.mrb[0].mxu0
          %v799 = vadd.f32 0.0, %v798
          %v800 = vpop.f32.mrb[0].mxu0
          %801 = vmatprep.mubr.bf16.mxu0 0
          %802 = vmatmul.mubr.bf16.gmra.mrb[0].mxu0 %v744
          %v803 = vpop.f32.mrb[0].mxu0
          %v804 = vadd.f32 0.0, %v803
          %v805 = vpop.f32.mrb[0].mxu0
          %v806 = vpop.f32.mrb[0].mxu0
          %v807 = vadd.f32 0.0, %v806
          %v808 = vpop.f32.mrb[0].mxu0
          %809 = vmatprep.mubr.bf16.mxu0 0
          %810 = vmatmul.mubr.bf16.gmra.mrb[0].mxu0 %v747
          %v811 = vpop.f32.mrb[0].mxu0
          %v812 = vadd.f32 0.0, %v811
          %v813 = vpop.f32.mrb[0].mxu0
          %v814 = vpop.f32.mrb[0].mxu0
          %v815 = vadd.f32 0.0, %v814
          %v816 = vpop.f32.mrb[0].mxu0
          %817 = vdwg.mxu0
          %v818 = vadd.f32 %v605, %v788
          %v819 = vadd.f32 %v606, %v791
          %v820 = vadd.f32 %v607, %v796
          %v821 = vadd.f32 %v608, %v799
          %v822 = vadd.f32 %v609, %v804
          %v823 = vadd.f32 %v610, %v807
          %v824 = vadd.f32 %v611, %v812
          %v825 = vadd.f32 %v612, %v815
        $region109: #{simple_cnn_forward.1} parent=83 // loop_footer
          %s604 = sadd.s32 1, %s600
        $region110: #{simple_cnn_forward.1} parent=83 // loop_footer_branch
          %599 = sbr.rel target = $region106
        $region111: #{simple_cnn_forward.1} parent=83 // loop_exit
          _
        %v826 = vld [vmem:[%s3] sm:$0x1]
        %v828 = vlaneseq
        %v829 = vshrl.u32 %v828, 7
        %v830 = vsub.s32 0, %v829
        %v831 = vrot.slane %v826, %v830
        %v833 = vadd.f32 %v605, %v831
        %v834 = vadd.f32 %v606, %v831
        %v835 = vadd.f32 %v607, %v831
        %v836 = vadd.f32 %v608, %v831
        %v837 = vadd.f32 %v609, %v831
        %v838 = vadd.f32 %v610, %v831
        %v839 = vadd.f32 %v611, %v831
        %v840 = vadd.f32 %v612, %v831
        %v841 = vmax.f32 %v833, 0.0
        %v842 = vmax.f32 %v834, 0.0
        %v843 = vmax.f32 %v835, 0.0
        %v844 = vmax.f32 %v836, 0.0
        %v845 = vmax.f32 %v837, 0.0
        %v846 = vmax.f32 %v838, 0.0
        %v847 = vmax.f32 %v839, 0.0
        %v848 = vmax.f32 %v840, 0.0
        %v849 = vpack.c.bf16 %v842, %v841
        %v850 = vpack.c.bf16 %v844, %v843
        %v851 = vpack.c.bf16 %v846, %v845
        %v852 = vpack.c.bf16 %v848, %v847
        loop: start=0, step=1, limit=25
        $region112: #{simple_cnn_forward.1} parent=83 // loop_pre_header
          _
        $region113: #{simple_cnn_forward.1} parent=83 // loop_header
          %s854 = sphi 0, %s858
          %p855 = scmp.ge.s32.totalorder %s854, 25
          %v859 = vphi 0.0, %v981
          %v860 = vphi 0.0, %v982
        $region114: #{simple_cnn_forward.1} parent=83 // loop_header_branch
          %857 = sbr.rel (%p855) target = $region118
        $region115: #{simple_cnn_forward.1} parent=83 // loop_body
          %s861 = smul.u32 %s854, 2
          %s862 = smul.addr %s861, 4
          %s863 = scalar_lea.vmem [#allocation5], %s862
          %v864 = vld [vmem:[%s863] sm:$0xf]
          %v865 = vld [vmem:[%s863 + $0x4] sm:$0xf]
          %v868 = vunpack.c.l.b16 %v864
          %v869 = vunpack.c.l.b16 %v865
          %v870 = vpack.c.b16 %v869, %v868
          %vm871 = vcmask 523264
          %v873 = vsel %vm871, %v870, 0
          %875 = vmatprep.subr.bf16.mxu0 0
          %876 = vmatpush1.bf16.msra.mxu0 %v849
          %877 = vmatprep.subr.bf16.mxu0 0
          %878 = vmatpush1.bf16.msra.mxu0 %v850
          %879 = vmatprep.subr.bf16.mxu0 0
          %880 = vmatpush1.bf16.msra.mxu0 %v851
          %881 = vmatprep.subr.bf16.mxu0 0
          %882 = vmatpush1.bf16.msra.mxu0 %v852
          %883 = vmatprep.subr.bf16.mxu0 0
          %884 = vmatpush1.bf16.msra.mxu0 0
          %885 = vmatprep.subr.bf16.mxu0 0
          %886 = vmatpush1.bf16.msra.mxu0 0
          %887 = vmatprep.subr.bf16.mxu0 0
          %888 = vmatpush1.bf16.msra.mxu0 0
          %889 = vmatprep.subr.bf16.mxu0 0
          %890 = vmatpush1.bf16.msra.mxu0 0
          %891 = vmatprep.subr.bf16.mxu0 0
          %892 = vmatpush1.bf16.msra.mxu0 0
          %893 = vmatprep.subr.bf16.mxu0 0
          %894 = vmatpush1.bf16.msra.mxu0 0
          %895 = vmatprep.subr.bf16.mxu0 0
          %896 = vmatpush1.bf16.msra.mxu0 0
          %897 = vmatprep.subr.bf16.mxu0 0
          %898 = vmatpush1.bf16.msra.mxu0 0
          %899 = vmatprep.subr.bf16.mxu0 0
          %900 = vmatpush1.bf16.msra.mxu0 0
          %901 = vmatprep.subr.bf16.mxu0 0
          %902 = vmatpush1.bf16.msra.mxu0 0
          %903 = vmatprep.subr.bf16.mxu0 0
          %904 = vmatpush1.bf16.msra.mxu0 0
          %905 = vmatprep.subr.bf16.mxu0 0
          %906 = vmatpush1.bf16.msra.mxu0 0
          %907 = vmatprep.mubr.bf16.mxu0 0
          %908 = vmatmul.mubr.bf16.gmra.mrb[0].mxu0 %v873
          %v909 = vpop.f32.mrb[0].mxu0
          %v910 = vadd.f32 0.0, %v909
          %v911 = vpop.f32.mrb[0].mxu0
          %v912 = vpop.f32.mrb[0].mxu0
          %v913 = vadd.f32 0.0, %v912
          %v914 = vpop.f32.mrb[0].mxu0
          %915 = vdwg.mxu0
          %v916 = vpack.c.bf16 %v913, %v910
          %s917 = smul.u32 %s854, 4
          %s918 = smul.addr %s917, 4
          %s919 = scalar_lea.vmem [#allocation7], %s918
          %v920 = vld [vmem:[%s919] sm:$0xf]
          %v921 = vld [vmem:[%s919 + $0x4] sm:$0xf]
          %v922 = vld [vmem:[%s919 + $0x8] sm:$0xf]
          %v923 = vld [vmem:[%s919 + $0xc] sm:$0xf]
          %v928 = vunpack.c.l.b16 %v920
          %v929 = vunpack.c.l.b16 %v921
          %v930 = vunpack.c.l.b16 %v922
          %v931 = vunpack.c.l.b16 %v923
          %v932 = vpack.c.b16 %v929, %v928
          %v933 = vpack.c.b16 %v931, %v930
          %vm936 = vcmask 261120
          %v938 = vsel %vm936, %v916, 0
          %940 = vmatprep.subr.bf16.mxu0 0
          %941 = vmatpush1.bf16.msra.mxu0 %v932
          %942 = vmatprep.subr.bf16.mxu0 0
          %943 = vmatpush1.bf16.msra.mxu0 %v933
          %944 = vmatprep.subr.bf16.mxu0 0
          %945 = vmatpush1.bf16.msra.mxu0 0
          %946 = vmatprep.subr.bf16.mxu0 0
          %947 = vmatpush1.bf16.msra.mxu0 0
          %948 = vmatprep.subr.bf16.mxu0 0
          %949 = vmatpush1.bf16.msra.mxu0 0
          %950 = vmatprep.subr.bf16.mxu0 0
          %951 = vmatpush1.bf16.msra.mxu0 0
          %952 = vmatprep.subr.bf16.mxu0 0
          %953 = vmatpush1.bf16.msra.mxu0 0
          %954 = vmatprep.subr.bf16.mxu0 0
          %955 = vmatpush1.bf16.msra.mxu0 0
          %956 = vmatprep.subr.bf16.mxu0 0
          %957 = vmatpush1.bf16.msra.mxu0 0
          %958 = vmatprep.subr.bf16.mxu0 0
          %959 = vmatpush1.bf16.msra.mxu0 0
          %960 = vmatprep.subr.bf16.mxu0 0
          %961 = vmatpush1.bf16.msra.mxu0 0
          %962 = vmatprep.subr.bf16.mxu0 0
          %963 = vmatpush1.bf16.msra.mxu0 0
          %964 = vmatprep.subr.bf16.mxu0 0
          %965 = vmatpush1.bf16.msra.mxu0 0
          %966 = vmatprep.subr.bf16.mxu0 0
          %967 = vmatpush1.bf16.msra.mxu0 0
          %968 = vmatprep.subr.bf16.mxu0 0
          %969 = vmatpush1.bf16.msra.mxu0 0
          %970 = vmatprep.subr.bf16.mxu0 0
          %971 = vmatpush1.bf16.msra.mxu0 0
          %972 = vmatprep.mubr.bf16.mxu0 0
          %973 = vmatmul.mubr.bf16.gmra.mrb[0].mxu0 %v938
          %v974 = vpop.f32.mrb[0].mxu0
          %v975 = vadd.f32 0.0, %v974
          %v976 = vpop.f32.mrb[0].mxu0
          %v977 = vpop.f32.mrb[0].mxu0
          %v978 = vadd.f32 0.0, %v977
          %v979 = vpop.f32.mrb[0].mxu0
          %980 = vdwg.mxu0
          %v981 = vadd.f32 %v859, %v975
          %v982 = vadd.f32 %v860, %v978
        $region116: #{simple_cnn_forward.1} parent=83 // loop_footer
          %s858 = sadd.s32 1, %s854
        $region117: #{simple_cnn_forward.1} parent=83 // loop_footer_branch
          %853 = sbr.rel target = $region113
        $region118: #{simple_cnn_forward.1} parent=83 // loop_exit
          _
        %v983 = vld [vmem:[%s6] sm:$0x1]
        %v985 = vlaneseq
        %v986 = vshrl.u32 %v985, 7
        %v987 = vsub.s32 0, %v986
        %v988 = vrot.slane %v983, %v987
        %v990 = vadd.f32 %v859, %v988
        %v991 = vadd.f32 %v860, %v988
        %v992 = vmax.f32 %v990, 0.0
        %v993 = vmax.f32 %v991, 0.0
        %v994 = vpack.c.bf16 %v993, %v992
        loop: start=0, step=1, limit=25
        $region119: #{simple_cnn_forward.1} parent=83 // loop_pre_header
          _
        $region120: #{simple_cnn_forward.1} parent=83 // loop_header
          %s996 = sphi 0, %s1000
          %p997 = scmp.ge.s32.totalorder %s996, 25
          %v1001 = vphi 0.0, %v1129
        $region121: #{simple_cnn_forward.1} parent=83 // loop_header_branch
          %999 = sbr.rel (%p997) target = $region125
        $region122: #{simple_cnn_forward.1} parent=83 // loop_body
          %s1002 = smul.addr %s996, 2
          %s1003 = scalar_lea.vmem %s7, %s1002
          %v1004 = vld [vmem:[%s1003] sm:$0x3]
          %vm1005 = vcmask 130048
          %v1007 = vsel %vm1005, %v1004, 0
          %1009 = vmatprep.subr.bf16.mxu0 0
          %1010 = vmatpush1.bf16.msra.mxu0 %v994
          %1011 = vmatprep.subr.bf16.mxu0 0
          %1012 = vmatpush1.bf16.msra.mxu0 0
          %1013 = vmatprep.subr.bf16.mxu0 0
          %1014 = vmatpush1.bf16.msra.mxu0 0
          %1015 = vmatprep.subr.bf16.mxu0 0
          %1016 = vmatpush1.bf16.msra.mxu0 0
          %1017 = vmatprep.subr.bf16.mxu0 0
          %1018 = vmatpush1.bf16.msra.mxu0 0
          %1019 = vmatprep.subr.bf16.mxu0 0
          %1020 = vmatpush1.bf16.msra.mxu0 0
          %1021 = vmatprep.subr.bf16.mxu0 0
          %1022 = vmatpush1.bf16.msra.mxu0 0
          %1023 = vmatprep.subr.bf16.mxu0 0
          %1024 = vmatpush1.bf16.msra.mxu0 0
          %1025 = vmatprep.subr.bf16.mxu0 0
          %1026 = vmatpush1.bf16.msra.mxu0 0
          %1027 = vmatprep.subr.bf16.mxu0 0
          %1028 = vmatpush1.bf16.msra.mxu0 0
          %1029 = vmatprep.subr.bf16.mxu0 0
          %1030 = vmatpush1.bf16.msra.mxu0 0
          %1031 = vmatprep.subr.bf16.mxu0 0
          %1032 = vmatpush1.bf16.msra.mxu0 0
          %1033 = vmatprep.subr.bf16.mxu0 0
          %1034 = vmatpush1.bf16.msra.mxu0 0
          %1035 = vmatprep.subr.bf16.mxu0 0
          %1036 = vmatpush1.bf16.msra.mxu0 0
          %1037 = vmatprep.subr.bf16.mxu0 0
          %1038 = vmatpush1.bf16.msra.mxu0 0
          %1039 = vmatprep.subr.bf16.mxu0 0
          %1040 = vmatpush1.bf16.msra.mxu0 0
          %1041 = vmatprep.mubr.bf16.mxu0 0
          %1042 = vmatmul.mubr.bf16.gmra.mrb[0].mxu0 %v1007
          %v1043 = vpop.f32.mrb[0].mxu0
          %v1044 = vadd.f32 0.0, %v1043
          %v1045 = vpop.f32.mrb[0].mxu0
          %v1046 = vpop.f32.mrb[0].mxu0
          %v1047 = vpop.f32.mrb[0].mxu0
          %1048 = vdwg.mxu0
          %v1049 = vpack.c.bf16 %v1044, %v1044
          %s1050 = smul.u32 %s996, 8
          %s1051 = smul.addr %s1050, 4
          %s1052 = scalar_lea.vmem [#allocation8], %s1051
          %v1053 = vld [vmem:[%s1052] sm:$0xf]
          %v1054 = vld [vmem:[%s1052 + $0x4] sm:$0xf]
          %v1055 = vld [vmem:[%s1052 + $0x8] sm:$0xf]
          %v1056 = vld [vmem:[%s1052 + $0xc] sm:$0xf]
          %v1057 = vld [vmem:[%s1052 + $0x10] sm:$0xf]
          %v1058 = vld [vmem:[%s1052 + $0x14] sm:$0xf]
          %v1059 = vld [vmem:[%s1052 + $0x18] sm:$0xf]
          %v1060 = vld [vmem:[%s1052 + $0x1c] sm:$0xf]
          %v1069 = vunpack.c.l.b16 %v1053
          %v1070 = vunpack.c.l.b16 %v1054
          %v1071 = vunpack.c.l.b16 %v1055
          %v1072 = vunpack.c.l.b16 %v1056
          %v1073 = vunpack.c.l.b16 %v1057
          %v1074 = vunpack.c.l.b16 %v1058
          %v1075 = vunpack.c.l.b16 %v1059
          %v1076 = vunpack.c.l.b16 %v1060
          %v1077 = vpack.c.b16 %v1070, %v1069
          %v1078 = vpack.c.b16 %v1072, %v1071
          %v1079 = vpack.c.b16 %v1074, %v1073
          %v1080 = vpack.c.b16 %v1076, %v1075
          %vm1085 = vcmask 523264
          %v1087 = vsel %vm1085, %v1049, 0
          %1089 = vmatprep.subr.bf16.mxu0 0
          %1090 = vmatpush1.bf16.msra.mxu0 %v1077
          %1091 = vmatprep.subr.bf16.mxu0 0
          %1092 = vmatpush1.bf16.msra.mxu0 %v1078
          %1093 = vmatprep.subr.bf16.mxu0 0
          %1094 = vmatpush1.bf16.msra.mxu0 %v1079
          %1095 = vmatprep.subr.bf16.mxu0 0
          %1096 = vmatpush1.bf16.msra.mxu0 %v1080
          %1097 = vmatprep.subr.bf16.mxu0 0
          %1098 = vmatpush1.bf16.msra.mxu0 0
          %1099 = vmatprep.subr.bf16.mxu0 0
          %1100 = vmatpush1.bf16.msra.mxu0 0
          %1101 = vmatprep.subr.bf16.mxu0 0
          %1102 = vmatpush1.bf16.msra.mxu0 0
          %1103 = vmatprep.subr.bf16.mxu0 0
          %1104 = vmatpush1.bf16.msra.mxu0 0
          %1105 = vmatprep.subr.bf16.mxu0 0
          %1106 = vmatpush1.bf16.msra.mxu0 0
          %1107 = vmatprep.subr.bf16.mxu0 0
          %1108 = vmatpush1.bf16.msra.mxu0 0
          %1109 = vmatprep.subr.bf16.mxu0 0
          %1110 = vmatpush1.bf16.msra.mxu0 0
          %1111 = vmatprep.subr.bf16.mxu0 0
          %1112 = vmatpush1.bf16.msra.mxu0 0
          %1113 = vmatprep.subr.bf16.mxu0 0
          %1114 = vmatpush1.bf16.msra.mxu0 0
          %1115 = vmatprep.subr.bf16.mxu0 0
          %1116 = vmatpush1.bf16.msra.mxu0 0
          %1117 = vmatprep.subr.bf16.mxu0 0
          %1118 = vmatpush1.bf16.msra.mxu0 0
          %1119 = vmatprep.subr.bf16.mxu0 0
          %1120 = vmatpush1.bf16.msra.mxu0 0
          %1121 = vmatprep.mubr.bf16.mxu0 0
          %1122 = vmatmul.mubr.bf16.gmra.mrb[0].mxu0 %v1087
          %v1123 = vpop.f32.mrb[0].mxu0
          %v1124 = vadd.f32 0.0, %v1123
          %v1125 = vpop.f32.mrb[0].mxu0
          %v1126 = vpop.f32.mrb[0].mxu0
          %v1127 = vpop.f32.mrb[0].mxu0
          %1128 = vdwg.mxu0
          %v1129 = vadd.f32 %v1001, %v1124
        $region123: #{simple_cnn_forward.1} parent=83 // loop_footer
          %s1000 = sadd.s32 1, %s996
        $region124: #{simple_cnn_forward.1} parent=83 // loop_footer_branch
          %995 = sbr.rel target = $region120
        $region125: #{simple_cnn_forward.1} parent=83 // loop_exit
          _
        %v1130 = vld [vmem:[%s9] sm:$0x1]
        %v1132 = vlaneseq
        %v1133 = vshrl.u32 %v1132, 7
        %v1134 = vsub.s32 0, %v1133
        %v1135 = vrot.slane %v1130, %v1134
        %v1137 = vadd.f32 %v1001, %v1135
        %v1138 = vmax.f32 %v1137, 0.0
        %v1139 = vpack.c.bf16 %v1138, %v1138
        %v1140 = vld [vmem:[#allocation10] sm:$0xff]
        %v1141 = vld [vmem:[#allocation10 + $0x8] sm:$0xff]
        %v1142 = vld [vmem:[#allocation10 + $0x10] sm:$0xff]
        %v1143 = vld [vmem:[#allocation10 + $0x18] sm:$0xff]
        %v1144 = vld [vmem:[#allocation10 + $0x20] sm:$0xff]
        %v1145 = vld [vmem:[#allocation10 + $0x28] sm:$0xff]
        %v1146 = vld [vmem:[#allocation10 + $0x30] sm:$0xff]
        %v1147 = vld [vmem:[#allocation10 + $0x38] sm:$0xff]
        %v1148 = vld [vmem:[#allocation10 + $0x40] sm:$0xff]
        %v1149 = vld [vmem:[#allocation10 + $0x48] sm:$0xff]
        %v1150 = vld [vmem:[#allocation10 + $0x50] sm:$0xff]
        %v1151 = vld [vmem:[#allocation10 + $0x58] sm:$0xff]
        %v1152 = vld [vmem:[#allocation10 + $0x60] sm:$0xff]
        %v1153 = vld [vmem:[#allocation10 + $0x68] sm:$0xff]
        %v1154 = vld [vmem:[#allocation10 + $0x70] sm:$0xff]
        %v1155 = vld [vmem:[#allocation10 + $0x78] sm:$0xff]
        %s1156 = scalar_lea.vmem [#allocation10], 128
        %v1157 = vld [vmem:[%s1156] sm:$0xff]
        %v1158 = vld [vmem:[%s1156 + $0x8] sm:$0xff]
        %v1159 = vld [vmem:[%s1156 + $0x10] sm:$0xff]
        %v1160 = vld [vmem:[%s1156 + $0x18] sm:$0xff]
        %v1161 = vld [vmem:[%s1156 + $0x20] sm:$0xff]
        %v1162 = vld [vmem:[%s1156 + $0x28] sm:$0xff]
        %v1163 = vld [vmem:[%s1156 + $0x30] sm:$0xff]
        %v1164 = vld [vmem:[%s1156 + $0x38] sm:$0xff]
        %v1165 = vld [vmem:[%s1156 + $0x40] sm:$0xff]
        %v1166 = vld [vmem:[%s1156 + $0x48] sm:$0xff]
        %v1167 = vld [vmem:[%s1156 + $0x50] sm:$0xff]
        %v1168 = vld [vmem:[%s1156 + $0x58] sm:$0xff]
        %v1169 = vld [vmem:[%s1156 + $0x60] sm:$0xff]
        %v1170 = vld [vmem:[%s1156 + $0x68] sm:$0xff]
        %v1171 = vld [vmem:[%s1156 + $0x70] sm:$0xff]
        %v1172 = vld [vmem:[%s1156 + $0x78] sm:$0xff]
        %v1174 = vshrl.u32 %v1139, 16
        %v1193 = vunpack.c.l.b16 %v1157
        %v1194 = vunpack.c.h.b16 %v1157
        %v1195 = vunpack.c.l.b16 %v1158
        %v1196 = vunpack.c.h.b16 %v1158
        %v1197 = vunpack.c.l.b16 %v1159
        %v1198 = vunpack.c.h.b16 %v1159
        %v1199 = vunpack.c.l.b16 %v1160
        %v1200 = vunpack.c.h.b16 %v1160
        %v1201 = vunpack.c.l.b16 %v1161
        %v1202 = vunpack.c.h.b16 %v1161
        %v1203 = vunpack.c.l.b16 %v1162
        %v1204 = vunpack.c.h.b16 %v1162
        %v1205 = vunpack.c.l.b16 %v1163
        %v1206 = vunpack.c.h.b16 %v1163
        %v1207 = vunpack.c.l.b16 %v1164
        %v1208 = vunpack.c.h.b16 %v1164
        %v1209 = vunpack.c.l.b16 %v1165
        %v1210 = vunpack.c.h.b16 %v1165
        %v1211 = vunpack.c.l.b16 %v1166
        %v1212 = vunpack.c.h.b16 %v1166
        %v1213 = vunpack.c.l.b16 %v1167
        %v1214 = vunpack.c.h.b16 %v1167
        %v1215 = vunpack.c.l.b16 %v1168
        %v1216 = vunpack.c.h.b16 %v1168
        %v1217 = vunpack.c.l.b16 %v1169
        %v1218 = vunpack.c.h.b16 %v1169
        %v1219 = vunpack.c.l.b16 %v1170
        %v1220 = vunpack.c.h.b16 %v1170
        %v1221 = vunpack.c.l.b16 %v1171
        %v1222 = vunpack.c.h.b16 %v1171
        %v1223 = vunpack.c.l.b16 %v1172
        %v1224 = vunpack.c.h.b16 %v1172
        %v1225 = vpack.c.b16 %v1195, %v1193
        %v1226 = vpack.c.b16 %v1196, %v1194
        %v1227 = vpack.c.b16 %v1199, %v1197
        %v1228 = vpack.c.b16 %v1200, %v1198
        %v1229 = vpack.c.b16 %v1203, %v1201
        %v1230 = vpack.c.b16 %v1204, %v1202
        %v1231 = vpack.c.b16 %v1207, %v1205
        %v1232 = vpack.c.b16 %v1208, %v1206
        %v1233 = vpack.c.b16 %v1211, %v1209
        %v1234 = vpack.c.b16 %v1212, %v1210
        %v1235 = vpack.c.b16 %v1215, %v1213
        %v1236 = vpack.c.b16 %v1216, %v1214
        %v1237 = vpack.c.b16 %v1219, %v1217
        %v1238 = vpack.c.b16 %v1220, %v1218
        %v1239 = vpack.c.b16 %v1223, %v1221
        %v1240 = vpack.c.b16 %v1224, %v1222
        %1257 = vmatprep.subr.bf16.mxu0 %v1226
        %1258 = vmatpush1.bf16.msra.mxu0 %v1225
        %1259 = vmatprep.subr.bf16.mxu0 %v1228
        %1260 = vmatpush1.bf16.msra.mxu0 %v1227
        %1261 = vmatprep.subr.bf16.mxu0 %v1230
        %1262 = vmatpush1.bf16.msra.mxu0 %v1229
        %1263 = vmatprep.subr.bf16.mxu0 %v1232
        %1264 = vmatpush1.bf16.msra.mxu0 %v1231
        %1265 = vmatprep.subr.bf16.mxu0 %v1234
        %1266 = vmatpush1.bf16.msra.mxu0 %v1233
        %1267 = vmatprep.subr.bf16.mxu0 %v1236
        %1268 = vmatpush1.bf16.msra.mxu0 %v1235
        %1269 = vmatprep.subr.bf16.mxu0 %v1238
        %1270 = vmatpush1.bf16.msra.mxu0 %v1237
        %1271 = vmatprep.subr.bf16.mxu0 %v1240
        %1272 = vmatpush1.bf16.msra.mxu0 %v1239
        %1273 = vmatprep.subr.bf16.mxu0 0
        %1274 = vmatpush1.bf16.msra.mxu0 0
        %1275 = vmatprep.subr.bf16.mxu0 0
        %1276 = vmatpush1.bf16.msra.mxu0 0
        %1277 = vmatprep.subr.bf16.mxu0 0
        %1278 = vmatpush1.bf16.msra.mxu0 0
        %1279 = vmatprep.subr.bf16.mxu0 0
        %1280 = vmatpush1.bf16.msra.mxu0 0
        %1281 = vmatprep.subr.bf16.mxu0 0
        %1282 = vmatpush1.bf16.msra.mxu0 0
        %1283 = vmatprep.subr.bf16.mxu0 0
        %1284 = vmatpush1.bf16.msra.mxu0 0
        %1285 = vmatprep.subr.bf16.mxu0 0
        %1286 = vmatpush1.bf16.msra.mxu0 0
        %1287 = vmatprep.subr.bf16.mxu0 0
        %1288 = vmatpush1.bf16.msra.mxu0 0
        %1289 = vmatprep.mubr.bf16.mxu0 0
        %1290 = vmatmul.mubr.bf16.gmra.mrb[0].mxu0 %v1174
        %v1291 = vpop.f32.mrb[0].mxu0
        %v1292 = vadd.f32 0.0, %v1291
        %v1293 = vpop.f32.mrb[0].mxu0
        %v1294 = vadd.f32 0.0, %v1293
        %v1295 = vpop.f32.mrb[0].mxu0
        %v1296 = vpop.f32.mrb[0].mxu0
        %1297 = vdwg.mxu0
        %v1314 = vunpack.c.l.b16 %v1140
        %v1315 = vunpack.c.h.b16 %v1140
        %v1316 = vunpack.c.l.b16 %v1141
        %v1317 = vunpack.c.h.b16 %v1141
        %v1318 = vunpack.c.l.b16 %v1142
        %v1319 = vunpack.c.h.b16 %v1142
        %v1320 = vunpack.c.l.b16 %v1143
        %v1321 = vunpack.c.h.b16 %v1143
        %v1322 = vunpack.c.l.b16 %v1144
        %v1323 = vunpack.c.h.b16 %v1144
        %v1324 = vunpack.c.l.b16 %v1145
        %v1325 = vunpack.c.h.b16 %v1145
        %v1326 = vunpack.c.l.b16 %v1146
        %v1327 = vunpack.c.h.b16 %v1146
        %v1328 = vunpack.c.l.b16 %v1147
        %v1329 = vunpack.c.h.b16 %v1147
        %v1330 = vunpack.c.l.b16 %v1148
        %v1331 = vunpack.c.h.b16 %v1148
        %v1332 = vunpack.c.l.b16 %v1149
        %v1333 = vunpack.c.h.b16 %v1149
        %v1334 = vunpack.c.l.b16 %v1150
        %v1335 = vunpack.c.h.b16 %v1150
        %v1336 = vunpack.c.l.b16 %v1151
        %v1337 = vunpack.c.h.b16 %v1151
        %v1338 = vunpack.c.l.b16 %v1152
        %v1339 = vunpack.c.h.b16 %v1152
        %v1340 = vunpack.c.l.b16 %v1153
        %v1341 = vunpack.c.h.b16 %v1153
        %v1342 = vunpack.c.l.b16 %v1154
        %v1343 = vunpack.c.h.b16 %v1154
        %v1344 = vunpack.c.l.b16 %v1155
        %v1345 = vunpack.c.h.b16 %v1155
        %v1346 = vpack.c.b16 %v1316, %v1314
        %v1347 = vpack.c.b16 %v1317, %v1315
        %v1348 = vpack.c.b16 %v1320, %v1318
        %v1349 = vpack.c.b16 %v1321, %v1319
        %v1350 = vpack.c.b16 %v1324, %v1322
        %v1351 = vpack.c.b16 %v1325, %v1323
        %v1352 = vpack.c.b16 %v1328, %v1326
        %v1353 = vpack.c.b16 %v1329, %v1327
        %v1354 = vpack.c.b16 %v1332, %v1330
        %v1355 = vpack.c.b16 %v1333, %v1331
        %v1356 = vpack.c.b16 %v1336, %v1334
        %v1357 = vpack.c.b16 %v1337, %v1335
        %v1358 = vpack.c.b16 %v1340, %v1338
        %v1359 = vpack.c.b16 %v1341, %v1339
        %v1360 = vpack.c.b16 %v1344, %v1342
        %v1361 = vpack.c.b16 %v1345, %v1343
        %1378 = vmatprep.subr.bf16.mxu0 %v1347
        %1379 = vmatpush1.bf16.msra.mxu0 %v1346
        %1380 = vmatprep.subr.bf16.mxu0 %v1349
        %1381 = vmatpush1.bf16.msra.mxu0 %v1348
        %1382 = vmatprep.subr.bf16.mxu0 %v1351
        %1383 = vmatpush1.bf16.msra.mxu0 %v1350
        %1384 = vmatprep.subr.bf16.mxu0 %v1353
        %1385 = vmatpush1.bf16.msra.mxu0 %v1352
        %1386 = vmatprep.subr.bf16.mxu0 %v1355
        %1387 = vmatpush1.bf16.msra.mxu0 %v1354
        %1388 = vmatprep.subr.bf16.mxu0 %v1357
        %1389 = vmatpush1.bf16.msra.mxu0 %v1356
        %1390 = vmatprep.subr.bf16.mxu0 %v1359
        %1391 = vmatpush1.bf16.msra.mxu0 %v1358
        %1392 = vmatprep.subr.bf16.mxu0 %v1361
        %1393 = vmatpush1.bf16.msra.mxu0 %v1360
        %1394 = vmatprep.subr.bf16.mxu0 0
        %1395 = vmatpush1.bf16.msra.mxu0 0
        %1396 = vmatprep.subr.bf16.mxu0 0
        %1397 = vmatpush1.bf16.msra.mxu0 0
        %1398 = vmatprep.subr.bf16.mxu0 0
        %1399 = vmatpush1.bf16.msra.mxu0 0
        %1400 = vmatprep.subr.bf16.mxu0 0
        %1401 = vmatpush1.bf16.msra.mxu0 0
        %1402 = vmatprep.subr.bf16.mxu0 0
        %1403 = vmatpush1.bf16.msra.mxu0 0
        %1404 = vmatprep.subr.bf16.mxu0 0
        %1405 = vmatpush1.bf16.msra.mxu0 0
        %1406 = vmatprep.subr.bf16.mxu0 0
        %1407 = vmatpush1.bf16.msra.mxu0 0
        %1408 = vmatprep.subr.bf16.mxu0 0
        %1409 = vmatpush1.bf16.msra.mxu0 0
        %1410 = vmatprep.mubr.bf16.mxu0 0
        %1411 = vmatmul.mubr.bf16.gmra.mrb[0].mxu0 %v1139
        %v1412 = vpop.f32.mrb[0].mxu0
        %v1413 = vadd.f32 %v1292, %v1412
        %v1414 = vpop.f32.mrb[0].mxu0
        %v1415 = vadd.f32 %v1294, %v1414
        %v1416 = vpop.f32.mrb[0].mxu0
        %v1417 = vpop.f32.mrb[0].mxu0
        %1418 = vdwg.mxu0
        %s1419 = scalar_lea.vmem [#allocation10], 256
        %v1420 = vld [vmem:[%s1419] sm:$0xff]
        %v1421 = vld [vmem:[%s1419 + $0x8] sm:$0xff]
        %v1422 = vld [vmem:[%s1419 + $0x10] sm:$0xff]
        %v1423 = vld [vmem:[%s1419 + $0x18] sm:$0xff]
        %v1424 = vld [vmem:[%s1419 + $0x20] sm:$0xff]
        %v1425 = vld [vmem:[%s1419 + $0x28] sm:$0xff]
        %v1426 = vld [vmem:[%s1419 + $0x30] sm:$0xff]
        %v1427 = vld [vmem:[%s1419 + $0x38] sm:$0xff]
        %v1428 = vld [vmem:[%s1419 + $0x40] sm:$0xff]
        %v1429 = vld [vmem:[%s1419 + $0x48] sm:$0xff]
        %v1430 = vld [vmem:[%s1419 + $0x50] sm:$0xff]
        %v1431 = vld [vmem:[%s1419 + $0x58] sm:$0xff]
        %v1432 = vld [vmem:[%s1419 + $0x60] sm:$0xff]
        %v1433 = vld [vmem:[%s1419 + $0x68] sm:$0xff]
        %v1434 = vld [vmem:[%s1419 + $0x70] sm:$0xff]
        %v1435 = vld [vmem:[%s1419 + $0x78] sm:$0xff]
        %v1437 = vrot.slane %v1139, 1
        %v1455 = vunpack.c.l.b16 %v1420
        %v1456 = vunpack.c.h.b16 %v1420
        %v1457 = vunpack.c.l.b16 %v1421
        %v1458 = vunpack.c.h.b16 %v1421
        %v1459 = vunpack.c.l.b16 %v1422
        %v1460 = vunpack.c.h.b16 %v1422
        %v1461 = vunpack.c.l.b16 %v1423
        %v1462 = vunpack.c.h.b16 %v1423
        %v1463 = vunpack.c.l.b16 %v1424
        %v1464 = vunpack.c.h.b16 %v1424
        %v1465 = vunpack.c.l.b16 %v1425
        %v1466 = vunpack.c.h.b16 %v1425
        %v1467 = vunpack.c.l.b16 %v1426
        %v1468 = vunpack.c.h.b16 %v1426
        %v1469 = vunpack.c.l.b16 %v1427
        %v1470 = vunpack.c.h.b16 %v1427
        %v1471 = vunpack.c.l.b16 %v1428
        %v1472 = vunpack.c.h.b16 %v1428
        %v1473 = vunpack.c.l.b16 %v1429
        %v1474 = vunpack.c.h.b16 %v1429
        %v1475 = vunpack.c.l.b16 %v1430
        %v1476 = vunpack.c.h.b16 %v1430
        %v1477 = vunpack.c.l.b16 %v1431
        %v1478 = vunpack.c.h.b16 %v1431
        %v1479 = vunpack.c.l.b16 %v1432
        %v1480 = vunpack.c.h.b16 %v1432
        %v1481 = vunpack.c.l.b16 %v1433
        %v1482 = vunpack.c.h.b16 %v1433
        %v1483 = vunpack.c.l.b16 %v1434
        %v1484 = vunpack.c.h.b16 %v1434
        %v1485 = vunpack.c.l.b16 %v1435
        %v1486 = vunpack.c.h.b16 %v1435
        %v1487 = vpack.c.b16 %v1457, %v1455
        %v1488 = vpack.c.b16 %v1458, %v1456
        %v1489 = vpack.c.b16 %v1461, %v1459
        %v1490 = vpack.c.b16 %v1462, %v1460
        %v1491 = vpack.c.b16 %v1465, %v1463
        %v1492 = vpack.c.b16 %v1466, %v1464
        %v1493 = vpack.c.b16 %v1469, %v1467
        %v1494 = vpack.c.b16 %v1470, %v1468
        %v1495 = vpack.c.b16 %v1473, %v1471
        %v1496 = vpack.c.b16 %v1474, %v1472
        %v1497 = vpack.c.b16 %v1477, %v1475
        %v1498 = vpack.c.b16 %v1478, %v1476
        %v1499 = vpack.c.b16 %v1481, %v1479
        %v1500 = vpack.c.b16 %v1482, %v1480
        %v1501 = vpack.c.b16 %v1485, %v1483
        %v1502 = vpack.c.b16 %v1486, %v1484
        %1519 = vmatprep.subr.bf16.mxu0 %v1488
        %1520 = vmatpush1.bf16.msra.mxu0 %v1487
        %1521 = vmatprep.subr.bf16.mxu0 %v1490
        %1522 = vmatpush1.bf16.msra.mxu0 %v1489
        %1523 = vmatprep.subr.bf16.mxu0 %v1492
        %1524 = vmatpush1.bf16.msra.mxu0 %v1491
        %1525 = vmatprep.subr.bf16.mxu0 %v1494
        %1526 = vmatpush1.bf16.msra.mxu0 %v1493
        %1527 = vmatprep.subr.bf16.mxu0 %v1496
        %1528 = vmatpush1.bf16.msra.mxu0 %v1495
        %1529 = vmatprep.subr.bf16.mxu0 %v1498
        %1530 = vmatpush1.bf16.msra.mxu0 %v1497
        %1531 = vmatprep.subr.bf16.mxu0 %v1500
        %1532 = vmatpush1.bf16.msra.mxu0 %v1499
        %1533 = vmatprep.subr.bf16.mxu0 %v1502
        %1534 = vmatpush1.bf16.msra.mxu0 %v1501
        %1535 = vmatprep.subr.bf16.mxu0 0
        %1536 = vmatpush1.bf16.msra.mxu0 0
        %1537 = vmatprep.subr.bf16.mxu0 0
        %1538 = vmatpush1.bf16.msra.mxu0 0
        %1539 = vmatprep.subr.bf16.mxu0 0
        %1540 = vmatpush1.bf16.msra.mxu0 0
        %1541 = vmatprep.subr.bf16.mxu0 0
        %1542 = vmatpush1.bf16.msra.mxu0 0
        %1543 = vmatprep.subr.bf16.mxu0 0
        %1544 = vmatpush1.bf16.msra.mxu0 0
        %1545 = vmatprep.subr.bf16.mxu0 0
        %1546 = vmatpush1.bf16.msra.mxu0 0
        %1547 = vmatprep.subr.bf16.mxu0 0
        %1548 = vmatpush1.bf16.msra.mxu0 0
        %1549 = vmatprep.subr.bf16.mxu0 0
        %1550 = vmatpush1.bf16.msra.mxu0 0
        %1551 = vmatprep.mubr.bf16.mxu0 0
        %1552 = vmatmul.mubr.bf16.gmra.mrb[0].mxu0 %v1437
        %v1553 = vpop.f32.mrb[0].mxu0
        %v1554 = vadd.f32 0.0, %v1553
        %v1555 = vpop.f32.mrb[0].mxu0
        %v1556 = vadd.f32 0.0, %v1555
        %v1557 = vpop.f32.mrb[0].mxu0
        %v1558 = vpop.f32.mrb[0].mxu0
        %1559 = vdwg.mxu0
        %v1560 = vadd.f32 %v1413, %v1554
        %v1561 = vadd.f32 %v1415, %v1556
        %s1562 = scalar_lea.vmem [#allocation10], 384
        %v1563 = vld [vmem:[%s1562] sm:$0xff]
        %v1564 = vld [vmem:[%s1562 + $0x8] sm:$0xff]
        %v1565 = vld [vmem:[%s1562 + $0x10] sm:$0xff]
        %v1566 = vld [vmem:[%s1562 + $0x18] sm:$0xff]
        %v1567 = vld [vmem:[%s1562 + $0x20] sm:$0xff]
        %v1568 = vld [vmem:[%s1562 + $0x28] sm:$0xff]
        %v1569 = vld [vmem:[%s1562 + $0x30] sm:$0xff]
        %v1570 = vld [vmem:[%s1562 + $0x38] sm:$0xff]
        %v1571 = vld [vmem:[%s1562 + $0x40] sm:$0xff]
        %v1572 = vld [vmem:[%s1562 + $0x48] sm:$0xff]
        %v1573 = vld [vmem:[%s1562 + $0x50] sm:$0xff]
        %v1574 = vld [vmem:[%s1562 + $0x58] sm:$0xff]
        %v1575 = vld [vmem:[%s1562 + $0x60] sm:$0xff]
        %v1576 = vld [vmem:[%s1562 + $0x68] sm:$0xff]
        %v1577 = vld [vmem:[%s1562 + $0x70] sm:$0xff]
        %v1578 = vld [vmem:[%s1562 + $0x78] sm:$0xff]
        %v1579 = vrot.slane %v1174, 1
        %v1597 = vunpack.c.l.b16 %v1563
        %v1598 = vunpack.c.h.b16 %v1563
        %v1599 = vunpack.c.l.b16 %v1564
        %v1600 = vunpack.c.h.b16 %v1564
        %v1601 = vunpack.c.l.b16 %v1565
        %v1602 = vunpack.c.h.b16 %v1565
        %v1603 = vunpack.c.l.b16 %v1566
        %v1604 = vunpack.c.h.b16 %v1566
        %v1605 = vunpack.c.l.b16 %v1567
        %v1606 = vunpack.c.h.b16 %v1567
        %v1607 = vunpack.c.l.b16 %v1568
        %v1608 = vunpack.c.h.b16 %v1568
        %v1609 = vunpack.c.l.b16 %v1569
        %v1610 = vunpack.c.h.b16 %v1569
        %v1611 = vunpack.c.l.b16 %v1570
        %v1612 = vunpack.c.h.b16 %v1570
        %v1613 = vunpack.c.l.b16 %v1571
        %v1614 = vunpack.c.h.b16 %v1571
        %v1615 = vunpack.c.l.b16 %v1572
        %v1616 = vunpack.c.h.b16 %v1572
        %v1617 = vunpack.c.l.b16 %v1573
        %v1618 = vunpack.c.h.b16 %v1573
        %v1619 = vunpack.c.l.b16 %v1574
        %v1620 = vunpack.c.h.b16 %v1574
        %v1621 = vunpack.c.l.b16 %v1575
        %v1622 = vunpack.c.h.b16 %v1575
        %v1623 = vunpack.c.l.b16 %v1576
        %v1624 = vunpack.c.h.b16 %v1576
        %v1625 = vunpack.c.l.b16 %v1577
        %v1626 = vunpack.c.h.b16 %v1577
        %v1627 = vunpack.c.l.b16 %v1578
        %v1628 = vunpack.c.h.b16 %v1578
        %v1629 = vpack.c.b16 %v1599, %v1597
        %v1630 = vpack.c.b16 %v1600, %v1598
        %v1631 = vpack.c.b16 %v1603, %v1601
        %v1632 = vpack.c.b16 %v1604, %v1602
        %v1633 = vpack.c.b16 %v1607, %v1605
        %v1634 = vpack.c.b16 %v1608, %v1606
        %v1635 = vpack.c.b16 %v1611, %v1609
        %v1636 = vpack.c.b16 %v1612, %v1610
        %v1637 = vpack.c.b16 %v1615, %v1613
        %v1638 = vpack.c.b16 %v1616, %v1614
        %v1639 = vpack.c.b16 %v1619, %v1617
        %v1640 = vpack.c.b16 %v1620, %v1618
        %v1641 = vpack.c.b16 %v1623, %v1621
        %v1642 = vpack.c.b16 %v1624, %v1622
        %v1643 = vpack.c.b16 %v1627, %v1625
        %v1644 = vpack.c.b16 %v1628, %v1626
        %1661 = vmatprep.subr.bf16.mxu0 %v1630
        %1662 = vmatpush1.bf16.msra.mxu0 %v1629
        %1663 = vmatprep.subr.bf16.mxu0 %v1632
        %1664 = vmatpush1.bf16.msra.mxu0 %v1631
        %1665 = vmatprep.subr.bf16.mxu0 %v1634
        %1666 = vmatpush1.bf16.msra.mxu0 %v1633
        %1667 = vmatprep.subr.bf16.mxu0 %v1636
        %1668 = vmatpush1.bf16.msra.mxu0 %v1635
        %1669 = vmatprep.subr.bf16.mxu0 %v1638
        %1670 = vmatpush1.bf16.msra.mxu0 %v1637
        %1671 = vmatprep.subr.bf16.mxu0 %v1640
        %1672 = vmatpush1.bf16.msra.mxu0 %v1639
        %1673 = vmatprep.subr.bf16.mxu0 %v1642
        %1674 = vmatpush1.bf16.msra.mxu0 %v1641
        %1675 = vmatprep.subr.bf16.mxu0 %v1644
        %1676 = vmatpush1.bf16.msra.mxu0 %v1643
        %1677 = vmatprep.subr.bf16.mxu0 0
        %1678 = vmatpush1.bf16.msra.mxu0 0
        %1679 = vmatprep.subr.bf16.mxu0 0
        %1680 = vmatpush1.bf16.msra.mxu0 0
        %1681 = vmatprep.subr.bf16.mxu0 0
        %1682 = vmatpush1.bf16.msra.mxu0 0
        %1683 = vmatprep.subr.bf16.mxu0 0
        %1684 = vmatpush1.bf16.msra.mxu0 0
        %1685 = vmatprep.subr.bf16.mxu0 0
        %1686 = vmatpush1.bf16.msra.mxu0 0
        %1687 = vmatprep.subr.bf16.mxu0 0
        %1688 = vmatpush1.bf16.msra.mxu0 0
        %1689 = vmatprep.subr.bf16.mxu0 0
        %1690 = vmatpush1.bf16.msra.mxu0 0
        %1691 = vmatprep.subr.bf16.mxu0 0
        %1692 = vmatpush1.bf16.msra.mxu0 0
        %1693 = vmatprep.mubr.bf16.mxu0 0
        %1694 = vmatmul.mubr.bf16.gmra.mrb[0].mxu0 %v1579
        %v1695 = vpop.f32.mrb[0].mxu0
        %v1696 = vadd.f32 0.0, %v1695
        %v1697 = vpop.f32.mrb[0].mxu0
        %v1698 = vadd.f32 0.0, %v1697
        %v1699 = vpop.f32.mrb[0].mxu0
        %v1700 = vpop.f32.mrb[0].mxu0
        %1701 = vdwg.mxu0
        %v1702 = vadd.f32 %v1560, %v1696
        %v1703 = vadd.f32 %v1561, %v1698
        %v1704 = vld [vmem:[%s11] sm:$0x3]
        %v1706 = vlaneseq
        %v1707 = vshrl.u32 %v1706, 7
        %v1708 = vsub.s32 0, %v1707
        %v1709 = vrot.slane %v1704, %v1708
        %v1710 = vlaneseq
        %v1711 = vshrl.u32 %v1710, 7
        %v1712 = vsub.s32 1, %v1711
        %v1713 = vrot.slane %v1704, %v1712
        %v1716 = vadd.f32 %v1702, %v1709
        %v1717 = vadd.f32 %v1703, %v1713
        %v1718 = vmax.f32 %v1716, 0.0
        %v1719 = vmax.f32 %v1717, 0.0
        %v1720 = vpack.c.bf16 %v1718, %v1718
        %v1721 = vpack.c.bf16 %v1719, %v1719
        %v1722 = vld [vmem:[%s12] sm:$0xff]
        %v1723 = vld [vmem:[%s12 + $0x8] sm:$0xff]
        %v1724 = vld [vmem:[%s12 + $0x10] sm:$0xff]
        %v1725 = vld [vmem:[%s12 + $0x18] sm:$0xff]
        %v1726 = vld [vmem:[%s12 + $0x20] sm:$0xff]
        %v1727 = vld [vmem:[%s12 + $0x28] sm:$0xff]
        %v1728 = vld [vmem:[%s12 + $0x30] sm:$0xff]
        %v1729 = vld [vmem:[%s12 + $0x38] sm:$0xff]
        %v1730 = vld [vmem:[%s12 + $0x40] sm:$0xff]
        %v1731 = vld [vmem:[%s12 + $0x48] sm:$0xff]
        %v1732 = vld [vmem:[%s12 + $0x50] sm:$0xff]
        %v1733 = vld [vmem:[%s12 + $0x58] sm:$0xff]
        %v1734 = vld [vmem:[%s12 + $0x60] sm:$0xff]
        %v1735 = vld [vmem:[%s12 + $0x68] sm:$0xff]
        %v1736 = vld [vmem:[%s12 + $0x70] sm:$0xff]
        %v1737 = vld [vmem:[%s12 + $0x78] sm:$0xff]
        %v1738 = vld [vmem:[%s12 + $0x80] sm:$0xff]
        %v1739 = vld [vmem:[%s12 + $0x88] sm:$0xff]
        %v1740 = vld [vmem:[%s12 + $0x90] sm:$0xff]
        %v1741 = vld [vmem:[%s12 + $0x98] sm:$0xff]
        %v1742 = vld [vmem:[%s12 + $0xa0] sm:$0xff]
        %v1743 = vld [vmem:[%s12 + $0xa8] sm:$0xff]
        %v1744 = vld [vmem:[%s12 + $0xb0] sm:$0xff]
        %v1745 = vld [vmem:[%s12 + $0xb8] sm:$0xff]
        %v1746 = vld [vmem:[%s12 + $0xc0] sm:$0xff]
        %v1747 = vld [vmem:[%s12 + $0xc8] sm:$0xff]
        %v1748 = vld [vmem:[%s12 + $0xd0] sm:$0xff]
        %v1749 = vld [vmem:[%s12 + $0xd8] sm:$0xff]
        %v1750 = vld [vmem:[%s12 + $0xe0] sm:$0xff]
        %v1751 = vld [vmem:[%s12 + $0xe8] sm:$0xff]
        %v1752 = vld [vmem:[%s12 + $0xf0] sm:$0xff]
        %v1753 = vld [vmem:[%s12 + $0xf8] sm:$0xff]
        %v1754 = vld [vmem:[%s13] sm:$0x3]
        %v1787 = vunpack.c.l.b16 %v1722
        %v1788 = vunpack.c.h.b16 %v1722
        %v1789 = vunpack.c.l.b16 %v1723
        %v1790 = vunpack.c.h.b16 %v1723
        %v1791 = vunpack.c.l.b16 %v1724
        %v1792 = vunpack.c.h.b16 %v1724
        %v1793 = vunpack.c.l.b16 %v1725
        %v1794 = vunpack.c.h.b16 %v1725
        %v1795 = vunpack.c.l.b16 %v1726
        %v1796 = vunpack.c.h.b16 %v1726
        %v1797 = vunpack.c.l.b16 %v1727
        %v1798 = vunpack.c.h.b16 %v1727
        %v1799 = vunpack.c.l.b16 %v1728
        %v1800 = vunpack.c.h.b16 %v1728
        %v1801 = vunpack.c.l.b16 %v1729
        %v1802 = vunpack.c.h.b16 %v1729
        %v1803 = vunpack.c.l.b16 %v1730
        %v1804 = vunpack.c.h.b16 %v1730
        %v1805 = vunpack.c.l.b16 %v1731
        %v1806 = vunpack.c.h.b16 %v1731
        %v1807 = vunpack.c.l.b16 %v1732
        %v1808 = vunpack.c.h.b16 %v1732
        %v1809 = vunpack.c.l.b16 %v1733
        %v1810 = vunpack.c.h.b16 %v1733
        %v1811 = vunpack.c.l.b16 %v1734
        %v1812 = vunpack.c.h.b16 %v1734
        %v1813 = vunpack.c.l.b16 %v1735
        %v1814 = vunpack.c.h.b16 %v1735
        %v1815 = vunpack.c.l.b16 %v1736
        %v1816 = vunpack.c.h.b16 %v1736
        %v1817 = vunpack.c.l.b16 %v1737
        %v1818 = vunpack.c.h.b16 %v1737
        %v1819 = vunpack.c.l.b16 %v1738
        %v1820 = vunpack.c.h.b16 %v1738
        %v1821 = vunpack.c.l.b16 %v1739
        %v1822 = vunpack.c.h.b16 %v1739
        %v1823 = vunpack.c.l.b16 %v1740
        %v1824 = vunpack.c.h.b16 %v1740
        %v1825 = vunpack.c.l.b16 %v1741
        %v1826 = vunpack.c.h.b16 %v1741
        %v1827 = vunpack.c.l.b16 %v1742
        %v1828 = vunpack.c.h.b16 %v1742
        %v1829 = vunpack.c.l.b16 %v1743
        %v1830 = vunpack.c.h.b16 %v1743
        %v1831 = vunpack.c.l.b16 %v1744
        %v1832 = vunpack.c.h.b16 %v1744
        %v1833 = vunpack.c.l.b16 %v1745
        %v1834 = vunpack.c.h.b16 %v1745
        %v1835 = vunpack.c.l.b16 %v1746
        %v1836 = vunpack.c.h.b16 %v1746
        %v1837 = vunpack.c.l.b16 %v1747
        %v1838 = vunpack.c.h.b16 %v1747
        %v1839 = vunpack.c.l.b16 %v1748
        %v1840 = vunpack.c.h.b16 %v1748
        %v1841 = vunpack.c.l.b16 %v1749
        %v1842 = vunpack.c.h.b16 %v1749
        %v1843 = vunpack.c.l.b16 %v1750
        %v1844 = vunpack.c.h.b16 %v1750
        %v1845 = vunpack.c.l.b16 %v1751
        %v1846 = vunpack.c.h.b16 %v1751
        %v1847 = vunpack.c.l.b16 %v1752
        %v1848 = vunpack.c.h.b16 %v1752
        %v1849 = vunpack.c.l.b16 %v1753
        %v1850 = vunpack.c.h.b16 %v1753
        %v1851 = vpack.c.b16 %v1789, %v1787
        %v1852 = vpack.c.b16 %v1790, %v1788
        %v1853 = vpack.c.b16 %v1793, %v1791
        %v1854 = vpack.c.b16 %v1794, %v1792
        %v1855 = vpack.c.b16 %v1797, %v1795
        %v1856 = vpack.c.b16 %v1798, %v1796
        %v1857 = vpack.c.b16 %v1801, %v1799
        %v1858 = vpack.c.b16 %v1802, %v1800
        %v1859 = vpack.c.b16 %v1805, %v1803
        %v1860 = vpack.c.b16 %v1806, %v1804
        %v1861 = vpack.c.b16 %v1809, %v1807
        %v1862 = vpack.c.b16 %v1810, %v1808
        %v1863 = vpack.c.b16 %v1813, %v1811
        %v1864 = vpack.c.b16 %v1814, %v1812
        %v1865 = vpack.c.b16 %v1817, %v1815
        %v1866 = vpack.c.b16 %v1818, %v1816
        %v1867 = vpack.c.b16 %v1821, %v1819
        %v1868 = vpack.c.b16 %v1822, %v1820
        %v1869 = vpack.c.b16 %v1825, %v1823
        %v1870 = vpack.c.b16 %v1826, %v1824
        %v1871 = vpack.c.b16 %v1829, %v1827
        %v1872 = vpack.c.b16 %v1830, %v1828
        %v1873 = vpack.c.b16 %v1833, %v1831
        %v1874 = vpack.c.b16 %v1834, %v1832
        %v1875 = vpack.c.b16 %v1837, %v1835
        %v1876 = vpack.c.b16 %v1838, %v1836
        %v1877 = vpack.c.b16 %v1841, %v1839
        %v1878 = vpack.c.b16 %v1842, %v1840
        %v1879 = vpack.c.b16 %v1845, %v1843
        %v1880 = vpack.c.b16 %v1846, %v1844
        %v1881 = vpack.c.b16 %v1849, %v1847
        %v1882 = vpack.c.b16 %v1850, %v1848
        %v1916 = vlaneseq
        %v1917 = vshrl.u32 %v1916, 7
        %v1918 = vsub.s32 0, %v1917
        %v1919 = vrot.slane %v1754, %v1918
        %v1920 = vlaneseq
        %v1921 = vshrl.u32 %v1920, 7
        %v1922 = vsub.s32 1, %v1921
        %v1923 = vrot.slane %v1754, %v1922
        %1926 = vmatprep.subr.bf16.mxu0 %v1852
        %1927 = vmatpush1.bf16.msra.mxu0 %v1851
        %1928 = vmatprep.subr.bf16.mxu0 %v1854
        %1929 = vmatpush1.bf16.msra.mxu0 %v1853
        %1930 = vmatprep.subr.bf16.mxu0 %v1856
        %1931 = vmatpush1.bf16.msra.mxu0 %v1855
        %1932 = vmatprep.subr.bf16.mxu0 %v1858
        %1933 = vmatpush1.bf16.msra.mxu0 %v1857
        %1934 = vmatprep.subr.bf16.mxu0 %v1860
        %1935 = vmatpush1.bf16.msra.mxu0 %v1859
        %1936 = vmatprep.subr.bf16.mxu0 %v1862
        %1937 = vmatpush1.bf16.msra.mxu0 %v1861
        %1938 = vmatprep.subr.bf16.mxu0 %v1864
        %1939 = vmatpush1.bf16.msra.mxu0 %v1863
        %1940 = vmatprep.subr.bf16.mxu0 %v1866
        %1941 = vmatpush1.bf16.msra.mxu0 %v1865
        %1942 = vmatprep.subr.bf16.mxu0 %v1868
        %1943 = vmatpush1.bf16.msra.mxu0 %v1867
        %1944 = vmatprep.subr.bf16.mxu0 %v1870
        %1945 = vmatpush1.bf16.msra.mxu0 %v1869
        %1946 = vmatprep.subr.bf16.mxu0 %v1872
        %1947 = vmatpush1.bf16.msra.mxu0 %v1871
        %1948 = vmatprep.subr.bf16.mxu0 %v1874
        %1949 = vmatpush1.bf16.msra.mxu0 %v1873
        %1950 = vmatprep.subr.bf16.mxu0 %v1876
        %1951 = vmatpush1.bf16.msra.mxu0 %v1875
        %1952 = vmatprep.subr.bf16.mxu0 %v1878
        %1953 = vmatpush1.bf16.msra.mxu0 %v1877
        %1954 = vmatprep.subr.bf16.mxu0 %v1880
        %1955 = vmatpush1.bf16.msra.mxu0 %v1879
        %1956 = vmatprep.subr.bf16.mxu0 %v1882
        %1957 = vmatpush1.bf16.msra.mxu0 %v1881
        %1958 = vmatprep.mubr.bf16.mxu0 %v1721
        %1959 = vmatmul.mubr.bf16.gmra.mrb[0].mxu0 %v1720
        %v1960 = vpop.f32.mrb[0].mxu0
        %v1961 = vadd.f32 %v1919, %v1960
        %v1962 = vpop.f32.mrb[0].mxu0
        %v1963 = vadd.f32 %v1923, %v1962
        %v1964 = vpop.f32.mrb[0].mxu0
        %v1965 = vpop.f32.mrb[0].mxu0
        %1966 = vdwg.mxu0
        %v1967 = vmax.f32 %v1961, 0.0
        %v1968 = vmax.f32 %v1963, 0.0
        %v1969 = vpack.c.bf16 %v1967, %v1967
        %v1970 = vpack.c.bf16 %v1968, %v1968
        %v1971 = vld [vmem:[%s14] sm:$0xf]
        %v1972 = vld [vmem:[%s14 + $0x4] sm:$0xf]
        %v1973 = vld [vmem:[%s14 + $0x8] sm:$0xf]
        %v1974 = vld [vmem:[%s14 + $0xc] sm:$0xf]
        %v1975 = vld [vmem:[%s14 + $0x10] sm:$0xf]
        %v1976 = vld [vmem:[%s14 + $0x14] sm:$0xf]
        %v1977 = vld [vmem:[%s14 + $0x18] sm:$0xf]
        %v1978 = vld [vmem:[%s14 + $0x1c] sm:$0xf]
        %v1979 = vld [vmem:[%s14 + $0x20] sm:$0xf]
        %v1980 = vld [vmem:[%s14 + $0x24] sm:$0xf]
        %v1981 = vld [vmem:[%s14 + $0x28] sm:$0xf]
        %v1982 = vld [vmem:[%s14 + $0x2c] sm:$0xf]
        %v1983 = vld [vmem:[%s14 + $0x30] sm:$0xf]
        %v1984 = vld [vmem:[%s14 + $0x34] sm:$0xf]
        %v1985 = vld [vmem:[%s14 + $0x38] sm:$0xf]
        %v1986 = vld [vmem:[%s14 + $0x3c] sm:$0xf]
        %v1987 = vld [vmem:[%s14 + $0x40] sm:$0xf]
        %v1988 = vld [vmem:[%s14 + $0x44] sm:$0xf]
        %v1989 = vld [vmem:[%s14 + $0x48] sm:$0xf]
        %v1990 = vld [vmem:[%s14 + $0x4c] sm:$0xf]
        %v1991 = vld [vmem:[%s14 + $0x50] sm:$0xf]
        %v1992 = vld [vmem:[%s14 + $0x54] sm:$0xf]
        %v1993 = vld [vmem:[%s14 + $0x58] sm:$0xf]
        %v1994 = vld [vmem:[%s14 + $0x5c] sm:$0xf]
        %v1995 = vld [vmem:[%s14 + $0x60] sm:$0xf]
        %v1996 = vld [vmem:[%s14 + $0x64] sm:$0xf]
        %v1997 = vld [vmem:[%s14 + $0x68] sm:$0xf]
        %v1998 = vld [vmem:[%s14 + $0x6c] sm:$0xf]
        %v1999 = vld [vmem:[%s14 + $0x70] sm:$0xf]
        %v2000 = vld [vmem:[%s14 + $0x74] sm:$0xf]
        %v2001 = vld [vmem:[%s14 + $0x78] sm:$0xf]
        %v2002 = vld [vmem:[%s14 + $0x7c] sm:$0xf]
        %v2003 = vld [vmem:[%s15] sm:$0x1]
        %v2036 = vunpack.c.l.b16 %v1971
        %v2037 = vunpack.c.l.b16 %v1972
        %v2038 = vunpack.c.l.b16 %v1973
        %v2039 = vunpack.c.l.b16 %v1974
        %v2040 = vunpack.c.l.b16 %v1975
        %v2041 = vunpack.c.l.b16 %v1976
        %v2042 = vunpack.c.l.b16 %v1977
        %v2043 = vunpack.c.l.b16 %v1978
        %v2044 = vunpack.c.l.b16 %v1979
        %v2045 = vunpack.c.l.b16 %v1980
        %v2046 = vunpack.c.l.b16 %v1981
        %v2047 = vunpack.c.l.b16 %v1982
        %v2048 = vunpack.c.l.b16 %v1983
        %v2049 = vunpack.c.l.b16 %v1984
        %v2050 = vunpack.c.l.b16 %v1985
        %v2051 = vunpack.c.l.b16 %v1986
        %v2052 = vunpack.c.l.b16 %v1987
        %v2053 = vunpack.c.l.b16 %v1988
        %v2054 = vunpack.c.l.b16 %v1989
        %v2055 = vunpack.c.l.b16 %v1990
        %v2056 = vunpack.c.l.b16 %v1991
        %v2057 = vunpack.c.l.b16 %v1992
        %v2058 = vunpack.c.l.b16 %v1993
        %v2059 = vunpack.c.l.b16 %v1994
        %v2060 = vunpack.c.l.b16 %v1995
        %v2061 = vunpack.c.l.b16 %v1996
        %v2062 = vunpack.c.l.b16 %v1997
        %v2063 = vunpack.c.l.b16 %v1998
        %v2064 = vunpack.c.l.b16 %v1999
        %v2065 = vunpack.c.l.b16 %v2000
        %v2066 = vunpack.c.l.b16 %v2001
        %v2067 = vunpack.c.l.b16 %v2002
        %v2068 = vpack.c.b16 %v2037, %v2036
        %v2069 = vpack.c.b16 %v2039, %v2038
        %v2070 = vpack.c.b16 %v2041, %v2040
        %v2071 = vpack.c.b16 %v2043, %v2042
        %v2072 = vpack.c.b16 %v2045, %v2044
        %v2073 = vpack.c.b16 %v2047, %v2046
        %v2074 = vpack.c.b16 %v2049, %v2048
        %v2075 = vpack.c.b16 %v2051, %v2050
        %v2076 = vpack.c.b16 %v2053, %v2052
        %v2077 = vpack.c.b16 %v2055, %v2054
        %v2078 = vpack.c.b16 %v2057, %v2056
        %v2079 = vpack.c.b16 %v2059, %v2058
        %v2080 = vpack.c.b16 %v2061, %v2060
        %v2081 = vpack.c.b16 %v2063, %v2062
        %v2082 = vpack.c.b16 %v2065, %v2064
        %v2083 = vpack.c.b16 %v2067, %v2066
        %2100 = vmatprep.subr.bf16.mxu0 0
        %2101 = vmatpush1.bf16.msra.mxu0 %v2068
        %2102 = vmatprep.subr.bf16.mxu0 0
        %2103 = vmatpush1.bf16.msra.mxu0 %v2069
        %2104 = vmatprep.subr.bf16.mxu0 0
        %2105 = vmatpush1.bf16.msra.mxu0 %v2070
        %2106 = vmatprep.subr.bf16.mxu0 0
        %2107 = vmatpush1.bf16.msra.mxu0 %v2071
        %2108 = vmatprep.subr.bf16.mxu0 0
        %2109 = vmatpush1.bf16.msra.mxu0 %v2072
        %2110 = vmatprep.subr.bf16.mxu0 0
        %2111 = vmatpush1.bf16.msra.mxu0 %v2073
        %2112 = vmatprep.subr.bf16.mxu0 0
        %2113 = vmatpush1.bf16.msra.mxu0 %v2074
        %2114 = vmatprep.subr.bf16.mxu0 0
        %2115 = vmatpush1.bf16.msra.mxu0 %v2075
        %2116 = vmatprep.subr.bf16.mxu0 0
        %2117 = vmatpush1.bf16.msra.mxu0 %v2076
        %2118 = vmatprep.subr.bf16.mxu0 0
        %2119 = vmatpush1.bf16.msra.mxu0 %v2077
        %2120 = vmatprep.subr.bf16.mxu0 0
        %2121 = vmatpush1.bf16.msra.mxu0 %v2078
        %2122 = vmatprep.subr.bf16.mxu0 0
        %2123 = vmatpush1.bf16.msra.mxu0 %v2079
        %2124 = vmatprep.subr.bf16.mxu0 0
        %2125 = vmatpush1.bf16.msra.mxu0 %v2080
        %2126 = vmatprep.subr.bf16.mxu0 0
        %2127 = vmatpush1.bf16.msra.mxu0 %v2081
        %2128 = vmatprep.subr.bf16.mxu0 0
        %2129 = vmatpush1.bf16.msra.mxu0 %v2082
        %2130 = vmatprep.subr.bf16.mxu0 0
        %2131 = vmatpush1.bf16.msra.mxu0 %v2083
        %2132 = vmatprep.mubr.bf16.mxu0 %v1970
        %2133 = vmatmul.mubr.bf16.gmra.mrb[0].mxu0 %v1969
        %v2134 = vpop.f32.mrb[0].mxu0
        %v2135 = vadd.f32 %v2003, %v2134
        %v2136 = vpop.f32.mrb[0].mxu0
        %v2137 = vpop.f32.mrb[0].mxu0
        %v2138 = vpop.f32.mrb[0].mxu0
        %2139 = vdwg.mxu0
        %vm2140 = vcmask 40960
        %2141 = vst.msk [vmem:[%s586] sm:$0x1] %vm2140, %v2135
        %s2142 = sand.u32 %s382, 1
        %s2143 = scalar_lea.sflag [#allocation4], %s2142
        %s2144 = sand.u32 %s382, 1
        %s2145 = scalar_lea.vmem [#allocation11], %s2144
        // Predicated region
        $region126: #{simple_cnn_forward.1} parent=83 // pred_check
          %p2146 = pneg %p392
        $region127: #{simple_cnn_forward.1} parent=83 // pred_check_branch
          %2148 = sbr.rel (%p2146) target = $region129
        $region128: #{simple_cnn_forward.1} parent=83 // pred_region
          %s2150 = ssub.s32 16, 16
          %2151 = vsyncadd %s2143, %s2150
          %s2152 = smul.addr %s33, 16
          %s2153 = scalar_lea.hbm %s16, %s2152
          %s2155 = sshll.u32 %s2145, 4
          %s2156 = int_to_ptr.vmem [resolvable:$true] %s2155
          %2158 = dma.vmem_to_hbm [thread:$0]  %s2156, 16, %s2153, %s2143
        $region129: #{simple_cnn_forward.1} parent=83 // pred_fallthru
          _
      $region84: #{simple_cnn_forward.1} parent=5 // pred_fallthru
        _
      %p2159 = scmp.le.s32.totalorder 2, %s28
      // Predicated region
      $region130: #{simple_cnn_forward.1} parent=5 // pred_check
        %p2160 = pneg %p2159
      $region131: #{simple_cnn_forward.1} parent=5 // pred_check_branch
        %2162 = sbr.rel (%p2160) target = $region133
      $region132: #{simple_cnn_forward.1} parent=5 // pred_region
        %s2163 = ssub.s32 %s28, 2
        // Predicated region
        $region134: #{simple_cnn_forward.1} parent=132 // pred_check
          %p2164 = pneg %p398
        $region135: #{simple_cnn_forward.1} parent=132 // pred_check_branch
          %2166 = sbr.rel (%p2164) target = $region137
        $region136: #{simple_cnn_forward.1} parent=132 // pred_region
          %s2167 = sand.u32 %s383, 1
          %s2168 = scalar_lea.sflag [#allocation4], %s2167
          %s2169 = sand.u32 %s383, 1
          %s2170 = scalar_lea.vmem [#allocation11], %s2169
          %2171 = dma.done %s2168, 16
        $region137: #{simple_cnn_forward.1} parent=132 // pred_fallthru
          _
      $region133: #{simple_cnn_forward.1} parent=5 // pred_fallthru
        _
    $region6: #{simple_cnn_forward.1} parent=1 // loop_footer
      %s32 = sadd.s32 1, %s28
    $region7: #{simple_cnn_forward.1} parent=1 // loop_footer_branch
      %27 = sbr.rel target = $region3
    $region8: #{simple_cnn_forward.1} parent=1 // loop_exit
      _
    %2172 = vsyncpa [#allocation3], 1
    %s2173 = scalar_lea.sflag [#allocation3], 1
    %2174 = vsyncpa %s2173, 1
    %2175 = vsyncpa [#allocation6], 1
    %2176 = vsyncpa [#allocation9], 1
    %2177 = vsyncpa [#allocation4], 1
    %s2178 = scalar_lea.sflag [#allocation4], 1
    %2179 = vsyncpa %s2178, 1

</llo_original>
